<compile_context>
chip_gen: v7x
topology: tpu7x:2x2x1
jax: 0.10.0
libtpu: 0.0.40
codegen_flags: <defaults>
</compile_context>

<pallas_src>
import math
import jax
import jax.numpy as jnp
import numpy as np
from jax import lax
from jax.experimental import pallas as pl
from jax.experimental.pallas import tpu as pltpu

EMB = 32      # emb_dims (>= 10 -> the "big" branch of the module)
B   = 2
N   = 128     # number of action points
M   = 128     # number of anchor points
EPS = 1e-5

ONES_ROW_H0 = 32   # row index of the constant-ones row in the augmented activation


# ---------------------------------------------------------------------------
# Parameter construction (deterministic, synthetic) + BN folding (plain JAX)
# ---------------------------------------------------------------------------
def _fuse_bn(conv_w, gamma, beta, mean, var):
    """Fold inference BatchNorm1d into the preceding bias-free 1x1 Conv1d."""
    scale = gamma / jnp.sqrt(var + EPS)
    w = conv_w * scale[:, None]
    b = beta - mean * scale
    return w.astype(jnp.float32), b.reshape(-1, 1).astype(jnp.float32)


def init_params(key, emb_dims=EMB):
    def mlp(key, dims, out_dim):
        layers = []
        for i in range(len(dims) - 1):
            key, k1, k2, k3, k4, k5 = jax.random.split(key, 6)
            cin, cout = dims[i], dims[i + 1]
            w = jax.random.normal(k1, (cout, cin), jnp.float32) / math.sqrt(cin)
            gamma = 1.0 + 0.1 * jax.random.normal(k2, (cout,), jnp.float32)
            beta = 0.1 * jax.random.normal(k3, (cout,), jnp.float32)
            mean = 0.1 * jax.random.normal(k4, (cout,), jnp.float32)
            var = jnp.abs(1.0 + 0.1 * jax.random.normal(k5, (cout,), jnp.float32))
            layers.append(_fuse_bn(w, gamma, beta, mean, var))
        key, kf = jax.random.split(key)
        wf = jax.random.normal(kf, (out_dim, dims[-1]), jnp.float32) / math.sqrt(dims[-1])
        return layers, wf, key

    flow_layers, flow_final, key = mlp(
        key, [emb_dims, emb_dims // 2, emb_dims // 4, emb_dims // 8], 3)
    wt_layers, wt_final, key = mlp(
        key, [emb_dims, 64, 64, 64, 128, 512], 1)
    return flow_layers, flow_final, wt_layers, wt_final


# ---------------------------------------------------------------------------
# Weight packing.  Augmented blocks are [W | b] plus a ones-propagation row so
# every hidden layer is a single MXU op; all blocks are padded to 16-row
# multiples (bf16 sublane packing).  w5/wf are NOT augmented (K = 128 / 512).
#
# 128-lane slab row layout (bf16):
#   rows   0.. 31 : flow  L1 (16ch + ones)         } fused first layer,
#   rows  32..111 : weight L1 (64ch + ones)        } contracts h0 (48 rows)
#   rows 112..127 : flow  L2 (8ch + ones)            contracts 32
#   rows 128..143 : flow  L3 (4ch + ones)            contracts 16
#   rows 144..159 : flow  final (3ch, no bias/relu)  contracts 16
#   rows 160..239 : weight L2 (64ch + ones)          contracts 80
#   rows 240..319 : weight L3 (64ch + ones)          contracts 80
#   rows 320..447 : weight L4 (128ch, bias folded, no ones)  contracts 80
# Separate: w5 (512,128) bf16, wf (8,512) bf16, b5 (512,1) f32.
# ---------------------------------------------------------------------------
def _aug_block(w, b, rows, cols, ones_row):
    w = np.asarray(w, np.float32)
    co, ci = w.shape
    need_rows = co + (1 if ones_row else 0)
    assert rows >= need_rows and cols >= ci + 1
    blk = np.zeros((rows, cols), np.float32)
    blk[:co, :ci] = w
    if b is not None:
        blk[:co, ci] = np.asarray(b, np.float32).reshape(-1)
    if ones_row:
        blk[co, ci] = 1.0        # propagates the constant-ones activation row
    return blk


def pack_params(params):
    flow_layers, flow_final, wt_layers, wt_final = params
    (fw1, fb1), (fw2, fb2), (fw3, fb3) = flow_layers
    (ww1, wb1), (ww2, wb2), (ww3, wb3), (ww4, wb4), (ww5, wb5) = wt_layers

    assert fw1.shape == (16, 32) and fw2.shape == (8, 16) and fw3.shape == (4, 8)
    assert flow_final.shape == (3, 4)
    assert ww1.shape == (64, 32) and ww2.shape == (64, 64) and ww3.shape == (64, 64)
    assert ww4.shape == (128, 64) and ww5.shape == (512, 128)
    assert wt_final.shape == (1, 512)
    # Ones-row / bias-column propagation consistency: each layer's bias column
    # (at its input-channel count) must coincide with the previous layer's ones
    # row, which must lie inside the contracted column range, or biases drop.
    assert ONES_ROW_H0 == fw1.shape[1] == ww1.shape[1] == 32
    assert fw2.shape[1] == fw1.shape[0] and fw3.shape[1] == fw2.shape[0]
    assert flow_final.shape[1] == fw3.shape[0]
    assert ww2.shape[1] == ww1.shape[0] and ww3.shape[1] == ww2.shape[0]
    assert ww4.shape[1] == ww3.shape[0] and ww5.shape[1] == ww4.shape[0]
    assert wt_final.shape[1] == ww5.shape[0]

    blocks = [
        _aug_block(fw1, fb1, 32, 128, True),            # fused first layer (flow part)
        _aug_block(ww1, wb1, 80, 128, True),            # fused first layer (weight part)
        _aug_block(fw2, fb2, 16, 128, True),            # flow L2
        _aug_block(fw3, fb3, 16, 128, True),            # flow L3
        _aug_block(flow_final, None, 16, 128, False),   # flow final (no bias / relu)
        _aug_block(ww2, wb2, 80, 128, True),            # weight L2
        _aug_block(ww3, wb3, 80, 128, True),            # weight L3
        _aug_block(ww4, wb4, 128, 128, False),          # weight L4 (no ones row: w5 bias is separate)
    ]
    slab = np.concatenate(blocks, axis=0)
    assert slab.shape == (448, 128), slab.shape

    w5 = np.asarray(ww5, np.float32)                    # (512, 128), K exactly 128
    wf = np.zeros((8, 512), np.float32)
    wf[0:1, :] = np.asarray(wt_final, np.float32)       # (8, 512), K exactly 512
    b5 = np.asarray(wb5, np.float32).reshape(512, 1)    # VPU broadcast-add, kept f32

    return (jnp.asarray(slab, jnp.bfloat16),
            jnp.asarray(w5, jnp.bfloat16),
            jnp.asarray(wf, jnp.bfloat16),
            jnp.asarray(b5, jnp.float32))


# ---------------------------------------------------------------------------
# Pallas kernel wrapper
# ---------------------------------------------------------------------------
def residual_mlp_head(action_emb, anchor_emb, action_points, anchor_points,
                      packed, *, batch_per_step=None):
    slab, w5, wf, b5 = packed
    Bsz, C, Np = action_emb.shape
    Mp = anchor_emb.shape[2]
    assert C == EMB and Np % 128 == 0 and Mp % 128 == 0

    # Default: whole batch folded onto the lane axis in ONE grid step (full MXU
    # lane occupancy, weights fetched once).  Pass batch_per_step explicitly
    # (e.g. Bsz // 2) to shard a large batch across TensorCores.
    if batch_per_step is None:
        batch_per_step = Bsz
    bb = max(1, int(batch_per_step))
    while Bsz % bb:
        bb -= 1

    L, Lm = bb * Np, bb * Mp
    inv_sqrt_dk = 1.0 / math.sqrt(C)

    def kernel(ae_ref, ane_ref, ap_ref, anp_ref, slab_ref, w5_ref, wf_ref,
               b5_ref, out_ref):
        ae = ae_ref[...]                                           # (C, L) f32
        ae_bf = ae.astype(jnp.bfloat16)                            # hoisted casts
        ane_bf = ane_ref[...].astype(jnp.bfloat16)                 # (C, Lm)
        anp = anp_ref[...]                                         # (3, Lm) f32

        # ---- attention soft-correspondence (transposed-score layout) ----
        corr_blocks = []
        for j in range(bb):
            ae_j = ae_bf[:, j * Np:(j + 1) * Np]                   # (C, N)
            ane_j = ane_bf[:, j * Mp:(j + 1) * Mp]                 # (C, M)
            anp_j = anp[:, j * Mp:(j + 1) * Mp]                    # (3, M)
            # scores transposed: (M, N); softmax over the anchor (sublane) axis.
            sT = lax.dot_general(ane_j, ae_j, (((0,), (0,)), ((), ())),
                                 preferred_element_type=jnp.float32) * inv_sqrt_dk
            sT = sT - jnp.max(sT, axis=0, keepdims=True)
            e = jnp.exp(sT)
            p = e * pl.reciprocal(jnp.sum(e, axis=0, keepdims=True), approx=True)
            # correspondence matmul: p consumed transpose-free (canonical form).
            corr_blocks.append(
                lax.dot_general(anp_j, p, (((1,), (0,)), ((), ())),
                                preferred_element_type=jnp.float32))   # (3, N)
        corr = corr_blocks[0] if bb == 1 else jnp.concatenate(corr_blocks, axis=1)

        # ---- residual-flow MLP + per-point-weight MLP over all bb*N lanes ----
        # augmented activation: [action_emb ; ones row ; zero pad] -> (48, L)
        row = lax.broadcasted_iota(jnp.int32, (16, L), 0)
        pad = jnp.where(row == 0, 1.0, 0.0).astype(jnp.float32)
        h0 = jnp.concatenate([ae, pad], axis=0)                    # ones at row 32

        def mm(w_bf, x, relu=True):
            y = jnp.dot(w_bf, x.astype(jnp.bfloat16),
                        preferred_element_type=jnp.float32)
            return jnp.maximum(y, 0.0) if relu else y

        z1 = mm(slab_ref[0:112, 0:48], h0)     # fused flow-L1 + weight-L1 -> (112, L)
        h = z1[0:32, :]                        # flow branch:   16 ch + ones + pad
        g = z1[32:112, :]                      # weight branch: 64 ch + ones + pad

        h = mm(slab_ref[112:128, 0:32], h)                         # (16, L)
        h = mm(slab_ref[128:144, 0:16], h)                         # (16, L)
        res = mm(slab_ref[144:160, 0:16], h, relu=False)           # rows 0:3 valid

        g = mm(slab_ref[160:240, 0:80], g)                         # (80, L)
        g = mm(slab_ref[240:320, 0:80], g)                         # (80, L)
        g = mm(slab_ref[320:448, 0:80], g)                         # (128, L)
        g = jnp.maximum(
            jnp.dot(w5_ref[...], g.astype(jnp.bfloat16),
                    preferred_element_type=jnp.float32) + b5_ref[...],
            0.0)                                                   # (512, L)
        wt = mm(wf_ref[...], g, relu=False)                        # (8, L), row 0 valid

        # ---- assemble full (4, L) tile in registers; single store ----
        flow = res[0:3, :] + corr - ap_ref[...]
        out_ref[...] = jnp.concatenate([flow, wt[0:1, :]], axis=0)

    # layout plumbing: batch folded onto the (lane-dense) points axis
    ae2 = action_emb.transpose(1, 0, 2).reshape(C, Bsz * Np)
    ane2 = anchor_emb.transpose(1, 0, 2).reshape(C, Bsz * Mp)
    ap2 = action_points.transpose(1, 0, 2).reshape(3, Bsz * Np)
    anp2 = anchor_points.transpose(1, 0, 2).reshape(3, Bsz * Mp)

    in_specs = [
        pl.BlockSpec((C, L), lambda i: (0, i)),
        pl.BlockSpec((C, Lm), lambda i: (0, i)),
        pl.BlockSpec((3, L), lambda i: (0, i)),
        pl.BlockSpec((3, Lm), lambda i: (0, i)),
        pl.BlockSpec(slab.shape, lambda i: (0, 0)),   # weights: fetched once
        pl.BlockSpec(w5.shape, lambda i: (0, 0)),
        pl.BlockSpec(wf.shape, lambda i: (0, 0)),
        pl.BlockSpec(b5.shape, lambda i: (0, 0)),
    ]
    out_specs = pl.BlockSpec((4, L), lambda i: (0, i))

    out = pl.pallas_call(
        kernel,
        out_shape=jax.ShapeDtypeStruct((4, Bsz * Np), jnp.float32),
        grid=(Bsz // bb,),
        in_specs=in_specs,
        out_specs=out_specs,
        compiler_params=pltpu.CompilerParams(
            dimension_semantics=("parallel",)),
    )(ae2, ane2, ap2, anp2, slab, w5, wf, b5)

    return out.reshape(4, Bsz, Np).transpose(1, 0, 2)              # (B, 4, N)


# ---------------------------------------------------------------------------
# Pure-JAX reference (same math, all f32) for the correctness check
# ---------------------------------------------------------------------------
def reference(action_emb, anchor_emb, action_points, anchor_points, params):
    flow_layers, flow_final, wt_layers, wt_final = params
    d_k = action_emb.shape[1]
    scores = jnp.einsum('bcn,bcm->bnm', action_emb, anchor_emb) / math.sqrt(d_k)
    scores = jax.nn.softmax(scores, axis=2)
    corr_points = jnp.einsum('bcm,bnm->bcn', anchor_points, scores)
    corr_flow = corr_points - action_points

    def mlp(x, layers, final_w):
        for w, b in layers:
            x = jax.nn.relu(jnp.einsum('oc,bcn->bon', w, x) + b[None])
        return jnp.einsum('oc,bcn->bon', final_w, x)

    residual_flow = mlp(action_emb, flow_layers, flow_final)
    flow = residual_flow + corr_flow
    weight = mlp(action_emb, wt_layers, wt_final)
    return jnp.concatenate([flow, weight], axis=1)


if __name__ == "__main__":
    key = jax.random.PRNGKey(0)
    key, k1, k2, k3, k4, kp = jax.random.split(key, 6)
    action_emb = jax.random.normal(k1, (B, EMB, N), jnp.float32)
    anchor_emb = jax.random.normal(k2, (B, EMB, M), jnp.float32)
    action_points = jax.random.normal(k3, (B, 3, N), jnp.float32)
    anchor_points = jax.random.normal(k4, (B, 3, M), jnp.float32)
    params = init_params(kp)
    packed = pack_params(params)

    out = residual_mlp_head(action_emb, anchor_emb, action_points, anchor_points, packed)
    out = jax.block_until_ready(out)

    ref = reference(action_emb, anchor_emb, action_points, anchor_points, params)
    assert out.shape == (B, 4, N), out.shape
    # bf16 weights/activations on every MXU matmul (f32 accumulation) plus the
    # approx softmax reciprocal bound the error at a few percent; biases, the
    # residual add and the correspondence accumulation stay f32.
    np.testing.assert_allclose(np.asarray(out), np.asarray(ref), rtol=6e-2, atol=6e-2)
    print("KERNEL_OK")
</pallas_src>

<mosaic_0001>
module attributes {stable_mosaic.version = 11 : i64} {
  func.func @kernel(%arg0: i32, %arg1: memref<32x256xf32, #tpu.memory_space<vmem>>, %arg2: memref<32x256xf32, #tpu.memory_space<vmem>>, %arg3: memref<3x256xf32, #tpu.memory_space<vmem>>, %arg4: memref<3x256xf32, #tpu.memory_space<vmem>>, %arg5: memref<448x128xbf16, #tpu.memory_space<vmem>>, %arg6: memref<512x128xbf16, #tpu.memory_space<vmem>>, %arg7: memref<8x512xbf16, #tpu.memory_space<vmem>>, %arg8: memref<512x1xf32, #tpu.memory_space<vmem>>, %arg9: memref<4x256xf32, #tpu.memory_space<vmem>>) attributes {dimension_semantics = [#tpu.dimension_semantics<parallel>], iteration_bounds = array<i64: 1>, scalar_prefetch = 0 : i64, scratch_operands = 0 : i64, tpu.core_type = #tpu.core_type<tc>, window_params = [{transform_indices = @transform_0, window_bounds = array<i64: 32, 256>}, {transform_indices = @transform_1, window_bounds = array<i64: 32, 256>}, {transform_indices = @transform_2, window_bounds = array<i64: 3, 256>}, {transform_indices = @transform_3, window_bounds = array<i64: 3, 256>}, {pipeline_mode = #tpu.pipeline_mode<synchronous>, transform_indices = @transform_4, window_bounds = array<i64: 448, 128>}, {pipeline_mode = #tpu.pipeline_mode<synchronous>, transform_indices = @transform_5, window_bounds = array<i64: 512, 128>}, {pipeline_mode = #tpu.pipeline_mode<synchronous>, transform_indices = @transform_6, window_bounds = array<i64: 8, 512>}, {pipeline_mode = #tpu.pipeline_mode<synchronous>, transform_indices = @transform_7, window_bounds = array<i64: 512, 1>}, {transform_indices = @transform_8, window_bounds = array<i64: 4, 256>}]} {
    %c0 = arith.constant 0 : index
    %c0_0 = arith.constant 0 : index
    %0 = vector.load %arg1[%c0, %c0_0] : memref<32x256xf32, #tpu.memory_space<vmem>>, vector<32x256xf32>
    %1 = arith.truncf %0 : vector<32x256xf32> to vector<32x256xbf16>
    %c0_1 = arith.constant 0 : index
    %c0_2 = arith.constant 0 : index
    %2 = vector.load %arg2[%c0_1, %c0_2] : memref<32x256xf32, #tpu.memory_space<vmem>>, vector<32x256xf32>
    %3 = arith.truncf %2 : vector<32x256xf32> to vector<32x256xbf16>
    %c0_3 = arith.constant 0 : index
    %c0_4 = arith.constant 0 : index
    %4 = vector.load %arg4[%c0_3, %c0_4] : memref<3x256xf32, #tpu.memory_space<vmem>>, vector<3x256xf32>
    %5 = vector.extract_strided_slice %1 {offsets = [0, 0], sizes = [32, 128], strides = [1, 1]} : vector<32x256xbf16> to vector<32x128xbf16>
    %6 = vector.extract_strided_slice %3 {offsets = [0, 0], sizes = [32, 128], strides = [1, 1]} : vector<32x256xbf16> to vector<32x128xbf16>
    %7 = vector.extract_strided_slice %4 {offsets = [0, 0], sizes = [3, 128], strides = [1, 1]} : vector<3x256xf32> to vector<3x128xf32>
    %cst = arith.constant dense<0.000000e+00> : vector<128x128xf32>
    %8 = tpu.matmul %6, %5, %cst {dimension_numbers = #tpu.dot_dimension_numbers<[0], [0], [1], [1], [0, 1, 1, 1], [], []>} : vector<32x128xbf16>, vector<32x128xbf16>, vector<128x128xf32> -> vector<128x128xf32>
    %cst_5 = arith.constant 0.176776692 : f32
    %9 = vector.broadcast %cst_5 : f32 to vector<128x128xf32>
    %10 = arith.mulf %8, %9 : vector<128x128xf32>
    %cst_6 = arith.constant dense<0xFF800000> : vector<128xf32>
    %11 = vector.multi_reduction <maximumf>, %10, %cst_6 [0] : vector<128x128xf32> to vector<128xf32>
    %12 = vector.shape_cast %11 : vector<128xf32> to vector<1x128xf32>
    %13 = vector.broadcast %12 : vector<1x128xf32> to vector<128x128xf32>
    %14 = arith.subf %10, %13 : vector<128x128xf32>
    %15 = math.exp %14 : vector<128x128xf32>
    %cst_7 = arith.constant dense<0.000000e+00> : vector<128xf32>
    %16 = vector.multi_reduction <add>, %15, %cst_7 [0] : vector<128x128xf32> to vector<128xf32>
    %17 = vector.shape_cast %16 : vector<128xf32> to vector<1x128xf32>
    %18 = tpu.reciprocal %17 {approx = true} : vector<1x128xf32> -> vector<1x128xf32>
    %19 = vector.broadcast %18 : vector<1x128xf32> to vector<128x128xf32>
    %20 = arith.mulf %15, %19 : vector<128x128xf32>
    %cst_8 = arith.constant dense<0.000000e+00> : vector<3x128xf32>
    %21 = tpu.matmul %7, %20, %cst_8 {dimension_numbers = #tpu.dot_dimension_numbers<[1], [0], [0], [1], [0, 0, 1, 1], [], []>} : vector<3x128xf32>, vector<128x128xf32>, vector<3x128xf32> -> vector<3x128xf32>
    %22 = vector.extract_strided_slice %1 {offsets = [0, 128], sizes = [32, 128], strides = [1, 1]} : vector<32x256xbf16> to vector<32x128xbf16>
    %23 = vector.extract_strided_slice %3 {offsets = [0, 128], sizes = [32, 128], strides = [1, 1]} : vector<32x256xbf16> to vector<32x128xbf16>
    %24 = vector.extract_strided_slice %4 {offsets = [0, 128], sizes = [3, 128], strides = [1, 1]} : vector<3x256xf32> to vector<3x128xf32>
    %cst_9 = arith.constant dense<0.000000e+00> : vector<128x128xf32>
    %25 = tpu.matmul %23, %22, %cst_9 {dimension_numbers = #tpu.dot_dimension_numbers<[0], [0], [1], [1], [0, 1, 1, 1], [], []>} : vector<32x128xbf16>, vector<32x128xbf16>, vector<128x128xf32> -> vector<128x128xf32>
    %cst_10 = arith.constant 0.176776692 : f32
    %26 = vector.broadcast %cst_10 : f32 to vector<128x128xf32>
    %27 = arith.mulf %25, %26 : vector<128x128xf32>
    %cst_11 = arith.constant dense<0xFF800000> : vector<128xf32>
    %28 = vector.multi_reduction <maximumf>, %27, %cst_11 [0] : vector<128x128xf32> to vector<128xf32>
    %29 = vector.shape_cast %28 : vector<128xf32> to vector<1x128xf32>
    %30 = vector.broadcast %29 : vector<1x128xf32> to vector<128x128xf32>
    %31 = arith.subf %27, %30 : vector<128x128xf32>
    %32 = math.exp %31 : vector<128x128xf32>
    %cst_12 = arith.constant dense<0.000000e+00> : vector<128xf32>
    %33 = vector.multi_reduction <add>, %32, %cst_12 [0] : vector<128x128xf32> to vector<128xf32>
    %34 = vector.shape_cast %33 : vector<128xf32> to vector<1x128xf32>
    %35 = tpu.reciprocal %34 {approx = true} : vector<1x128xf32> -> vector<1x128xf32>
    %36 = vector.broadcast %35 : vector<1x128xf32> to vector<128x128xf32>
    %37 = arith.mulf %32, %36 : vector<128x128xf32>
    %cst_13 = arith.constant dense<0.000000e+00> : vector<3x128xf32>
    %38 = tpu.matmul %24, %37, %cst_13 {dimension_numbers = #tpu.dot_dimension_numbers<[1], [0], [0], [1], [0, 0, 1, 1], [], []>} : vector<3x128xf32>, vector<128x128xf32>, vector<3x128xf32> -> vector<3x128xf32>
    %39 = tpu.concatenate %21, %38 in 1 : vector<3x128xf32>, vector<3x128xf32> -> vector<3x256xf32>
    %40 = tpu.iota {dimensions = array<i32: 0>} : vector<16x256xi32>
    %c0_i32 = arith.constant 0 : i32
    %41 = vector.broadcast %c0_i32 : i32 to vector<16x256xi32>
    %42 = arith.cmpi eq, %40, %41 : vector<16x256xi32>
    %cst_14 = arith.constant 1.000000e+00 : f32
    %cst_15 = arith.constant 0.000000e+00 : f32
    %43 = vector.broadcast %cst_14 : f32 to vector<16x256xf32>
    %44 = vector.broadcast %cst_15 : f32 to vector<16x256xf32>
    %45 = arith.select %42, %43, %44 : vector<16x256xi1>, vector<16x256xf32>
    %46 = tpu.concatenate %0, %45 in 0 : vector<32x256xf32>, vector<16x256xf32> -> vector<48x256xf32>
    %c0_16 = arith.constant 0 : index
    %c0_17 = arith.constant 0 : index
    %47 = vector.load %arg5[%c0_16, %c0_17] : memref<448x128xbf16, #tpu.memory_space<vmem>>, vector<112x48xbf16>
    %48 = arith.truncf %46 : vector<48x256xf32> to vector<48x256xbf16>
    %cst_18 = arith.constant dense<0.000000e+00> : vector<112x256xf32>
    %49 = tpu.matmul %47, %48, %cst_18 {dimension_numbers = #tpu.dot_dimension_numbers<[1], [0], [0], [1], [0, 0, 1, 1], [], []>} : vector<112x48xbf16>, vector<48x256xbf16>, vector<112x256xf32> -> vector<112x256xf32>
    %cst_19 = arith.constant 0.000000e+00 : f32
    %50 = vector.broadcast %cst_19 : f32 to vector<112x256xf32>
    %51 = arith.maximumf %49, %50 : vector<112x256xf32>
    %52 = vector.extract_strided_slice %51 {offsets = [0, 0], sizes = [32, 256], strides = [1, 1]} : vector<112x256xf32> to vector<32x256xf32>
    %53 = vector.extract_strided_slice %51 {offsets = [32, 0], sizes = [80, 256], strides = [1, 1]} : vector<112x256xf32> to vector<80x256xf32>
    %c112 = arith.constant 112 : index
    %c0_20 = arith.constant 0 : index
    %54 = vector.load %arg5[%c112, %c0_20] : memref<448x128xbf16, #tpu.memory_space<vmem>>, vector<16x32xbf16>
    %55 = arith.truncf %52 : vector<32x256xf32> to vector<32x256xbf16>
    %cst_21 = arith.constant dense<0.000000e+00> : vector<16x256xf32>
    %56 = tpu.matmul %54, %55, %cst_21 {dimension_numbers = #tpu.dot_dimension_numbers<[1], [0], [0], [1], [0, 0, 1, 1], [], []>} : vector<16x32xbf16>, vector<32x256xbf16>, vector<16x256xf32> -> vector<16x256xf32>
    %cst_22 = arith.constant 0.000000e+00 : f32
    %57 = vector.broadcast %cst_22 : f32 to vector<16x256xf32>
    %58 = arith.maximumf %56, %57 : vector<16x256xf32>
    %c128 = arith.constant 128 : index
    %c0_23 = arith.constant 0 : index
    %59 = vector.load %arg5[%c128, %c0_23] : memref<448x128xbf16, #tpu.memory_space<vmem>>, vector<16x16xbf16>
    %60 = arith.truncf %58 : vector<16x256xf32> to vector<16x256xbf16>
    %cst_24 = arith.constant dense<0.000000e+00> : vector<16x256xf32>
    %61 = tpu.matmul %59, %60, %cst_24 {dimension_numbers = #tpu.dot_dimension_numbers<[1], [0], [0], [1], [0, 0, 1, 1], [], []>} : vector<16x16xbf16>, vector<16x256xbf16>, vector<16x256xf32> -> vector<16x256xf32>
    %cst_25 = arith.constant 0.000000e+00 : f32
    %62 = vector.broadcast %cst_25 : f32 to vector<16x256xf32>
    %63 = arith.maximumf %61, %62 : vector<16x256xf32>
    %c144 = arith.constant 144 : index
    %c0_26 = arith.constant 0 : index
    %64 = vector.load %arg5[%c144, %c0_26] : memref<448x128xbf16, #tpu.memory_space<vmem>>, vector<16x16xbf16>
    %65 = arith.truncf %63 : vector<16x256xf32> to vector<16x256xbf16>
    %cst_27 = arith.constant dense<0.000000e+00> : vector<16x256xf32>
    %66 = tpu.matmul %64, %65, %cst_27 {dimension_numbers = #tpu.dot_dimension_numbers<[1], [0], [0], [1], [0, 0, 1, 1], [], []>} : vector<16x16xbf16>, vector<16x256xbf16>, vector<16x256xf32> -> vector<16x256xf32>
    %c160 = arith.constant 160 : index
    %c0_28 = arith.constant 0 : index
    %67 = vector.load %arg5[%c160, %c0_28] : memref<448x128xbf16, #tpu.memory_space<vmem>>, vector<80x80xbf16>
    %68 = arith.truncf %53 : vector<80x256xf32> to vector<80x256xbf16>
    %cst_29 = arith.constant dense<0.000000e+00> : vector<80x256xf32>
    %69 = tpu.matmul %67, %68, %cst_29 {dimension_numbers = #tpu.dot_dimension_numbers<[1], [0], [0], [1], [0, 0, 1, 1], [], []>} : vector<80x80xbf16>, vector<80x256xbf16>, vector<80x256xf32> -> vector<80x256xf32>
    %cst_30 = arith.constant 0.000000e+00 : f32
    %70 = vector.broadcast %cst_30 : f32 to vector<80x256xf32>
    %71 = arith.maximumf %69, %70 : vector<80x256xf32>
    %c240 = arith.constant 240 : index
    %c0_31 = arith.constant 0 : index
    %72 = vector.load %arg5[%c240, %c0_31] : memref<448x128xbf16, #tpu.memory_space<vmem>>, vector<80x80xbf16>
    %73 = arith.truncf %71 : vector<80x256xf32> to vector<80x256xbf16>
    %cst_32 = arith.constant dense<0.000000e+00> : vector<80x256xf32>
    %74 = tpu.matmul %72, %73, %cst_32 {dimension_numbers = #tpu.dot_dimension_numbers<[1], [0], [0], [1], [0, 0, 1, 1], [], []>} : vector<80x80xbf16>, vector<80x256xbf16>, vector<80x256xf32> -> vector<80x256xf32>
    %cst_33 = arith.constant 0.000000e+00 : f32
    %75 = vector.broadcast %cst_33 : f32 to vector<80x256xf32>
    %76 = arith.maximumf %74, %75 : vector<80x256xf32>
    %c320 = arith.constant 320 : index
    %c0_34 = arith.constant 0 : index
    %77 = vector.load %arg5[%c320, %c0_34] : memref<448x128xbf16, #tpu.memory_space<vmem>>, vector<128x80xbf16>
    %78 = arith.truncf %76 : vector<80x256xf32> to vector<80x256xbf16>
    %cst_35 = arith.constant dense<0.000000e+00> : vector<128x256xf32>
    %79 = tpu.matmul %77, %78, %cst_35 {dimension_numbers = #tpu.dot_dimension_numbers<[1], [0], [0], [1], [0, 0, 1, 1], [], []>} : vector<128x80xbf16>, vector<80x256xbf16>, vector<128x256xf32> -> vector<128x256xf32>
    %cst_36 = arith.constant 0.000000e+00 : f32
    %80 = vector.broadcast %cst_36 : f32 to vector<128x256xf32>
    %81 = arith.maximumf %79, %80 : vector<128x256xf32>
    %c0_37 = arith.constant 0 : index
    %c0_38 = arith.constant 0 : index
    %82 = vector.load %arg6[%c0_37, %c0_38] : memref<512x128xbf16, #tpu.memory_space<vmem>>, vector<512x128xbf16>
    %83 = arith.truncf %81 : vector<128x256xf32> to vector<128x256xbf16>
    %cst_39 = arith.constant dense<0.000000e+00> : vector<512x256xf32>
    %84 = tpu.matmul %82, %83, %cst_39 {dimension_numbers = #tpu.dot_dimension_numbers<[1], [0], [0], [1], [0, 0, 1, 1], [], []>} : vector<512x128xbf16>, vector<128x256xbf16>, vector<512x256xf32> -> vector<512x256xf32>
    %c0_40 = arith.constant 0 : index
    %c0_41 = arith.constant 0 : index
    %85 = vector.load %arg8[%c0_40, %c0_41] : memref<512x1xf32, #tpu.memory_space<vmem>>, vector<512x1xf32>
    %86 = vector.broadcast %85 : vector<512x1xf32> to vector<512x256xf32>
    %87 = arith.addf %84, %86 : vector<512x256xf32>
    %cst_42 = arith.constant 0.000000e+00 : f32
    %88 = vector.broadcast %cst_42 : f32 to vector<512x256xf32>
    %89 = arith.maximumf %87, %88 : vector<512x256xf32>
    %c0_43 = arith.constant 0 : index
    %c0_44 = arith.constant 0 : index
    %90 = vector.load %arg7[%c0_43, %c0_44] : memref<8x512xbf16, #tpu.memory_space<vmem>>, vector<8x512xbf16>
    %91 = arith.truncf %89 : vector<512x256xf32> to vector<512x256xbf16>
    %cst_45 = arith.constant dense<0.000000e+00> : vector<8x256xf32>
    %92 = tpu.matmul %90, %91, %cst_45 {dimension_numbers = #tpu.dot_dimension_numbers<[1], [0], [0], [1], [0, 0, 1, 1], [], []>} : vector<8x512xbf16>, vector<512x256xbf16>, vector<8x256xf32> -> vector<8x256xf32>
    %93 = vector.extract_strided_slice %66 {offsets = [0, 0], sizes = [3, 256], strides = [1, 1]} : vector<16x256xf32> to vector<3x256xf32>
    %94 = arith.addf %93, %39 : vector<3x256xf32>
    %c0_46 = arith.constant 0 : index
    %c0_47 = arith.constant 0 : index
    %95 = vector.load %arg3[%c0_46, %c0_47] : memref<3x256xf32, #tpu.memory_space<vmem>>, vector<3x256xf32>
    %96 = arith.subf %94, %95 : vector<3x256xf32>
    %97 = vector.extract_strided_slice %92 {offsets = [0, 0], sizes = [1, 256], strides = [1, 1]} : vector<8x256xf32> to vector<1x256xf32>
    %98 = tpu.concatenate %96, %97 in 0 : vector<3x256xf32>, vector<1x256xf32> -> vector<4x256xf32>
    %c0_48 = arith.constant 0 : index
    %c0_49 = arith.constant 0 : index
    %99 = vector.load %arg9[%c0_48, %c0_49] : memref<4x256xf32, #tpu.memory_space<vmem>>, vector<4x256xf32>
    tpu.vector_store %arg9[%c0_48, %c0_49], %98 {strides = array<i32>} : memref<4x256xf32, #tpu.memory_space<vmem>>, vector<4x256xf32>,
    return
  }
  func.func @transform_0(%arg0: i32) -> (i32, i32) {
    %c0_i32 = arith.constant 0 : i32
    %c0_i32_0 = arith.constant 0 : i32
    return %c0_i32, %arg0 : i32, i32
  }
  func.func @transform_1(%arg0: i32) -> (i32, i32) {
    %c0_i32 = arith.constant 0 : i32
    %c0_i32_0 = arith.constant 0 : i32
    return %c0_i32, %arg0 : i32, i32
  }
  func.func @transform_2(%arg0: i32) -> (i32, i32) {
    %c0_i32 = arith.constant 0 : i32
    %c0_i32_0 = arith.constant 0 : i32
    return %c0_i32, %arg0 : i32, i32
  }
  func.func @transform_3(%arg0: i32) -> (i32, i32) {
    %c0_i32 = arith.constant 0 : i32
    %c0_i32_0 = arith.constant 0 : i32
    return %c0_i32, %arg0 : i32, i32
  }
  func.func @transform_4(%arg0: i32) -> (i32, i32) {
    %c0_i32 = arith.constant 0 : i32
    %c0_i32_0 = arith.constant 0 : i32
    %c0_i32_1 = arith.constant 0 : i32
    return %c0_i32, %c0_i32_0 : i32, i32
  }
  func.func @transform_5(%arg0: i32) -> (i32, i32) {
    %c0_i32 = arith.constant 0 : i32
    %c0_i32_0 = arith.constant 0 : i32
    %c0_i32_1 = arith.constant 0 : i32
    return %c0_i32, %c0_i32_0 : i32, i32
  }
  func.func @transform_6(%arg0: i32) -> (i32, i32) {
    %c0_i32 = arith.constant 0 : i32
    %c0_i32_0 = arith.constant 0 : i32
    %c0_i32_1 = arith.constant 0 : i32
    return %c0_i32, %c0_i32_0 : i32, i32
  }
  func.func @transform_7(%arg0: i32) -> (i32, i32) {
    %c0_i32 = arith.constant 0 : i32
    %c0_i32_0 = arith.constant 0 : i32
    %c0_i32_1 = arith.constant 0 : i32
    return %c0_i32, %c0_i32_0 : i32, i32
  }
  func.func @transform_8(%arg0: i32) -> (i32, i32) {
    %c0_i32 = arith.constant 0 : i32
    %c0_i32_0 = arith.constant 0 : i32
    return %c0_i32, %arg0 : i32, i32
  }
}

</mosaic_0001>

<llo_original>
// kernel: tpu_custom_call.1
$region0: #{tpu_custom_call.1}
  #allocation0 [shape = 'u32[]', space=smem, size = 0x4, offset = 0x4, fixed_abs, tag = 'smem constant byte address 0x4 - core index']
  #allocation1 [shape = 'u32[144,128]{1,0:T(1,128)}', space=vmem, size = 0x12000, scoped, tag = 'internal scratch']
  %s0 = inlined_call_operand.hbm [shape: f32[32,256], index: 0, kind: input, shape index: {}]
  %s1 = inlined_call_operand.hbm [shape: f32[32,256], index: 1, kind: input, shape index: {}]
  %s2 = inlined_call_operand.vmem [shape: f32[3,256], index: 2, kind: input, shape index: {}]
  %s3 = inlined_call_operand.vmem [shape: f32[3,256], index: 3, kind: input, shape index: {}]
  %s4 = inlined_call_operand.vmem [shape: bf16[448,128], index: 4, kind: input, shape index: {}]
  %s5 = inlined_call_operand.vmem [shape: bf16[512,128], index: 5, kind: input, shape index: {}]
  %s6 = inlined_call_operand.vmem [shape: bf16[8,512], index: 6, kind: input, shape index: {}]
  %s7 = inlined_call_operand.vmem [shape: f32[512,1], index: 7, kind: input, shape index: {}]
  %s8 = inlined_call_operand.hbm [shape: f32[4,256], index: 8, kind: output, shape index: {}]
  %s9 = sld [smem:[#allocation0]]
  $region50: #{tpu_custom_call.1} parent=0
    _
  %s11 = ssub.s32 1, %s9
  %s12 = scalar_select 0, %s11, %s9
  $region1: #{tpu_custom_call.1} parent=0
    #allocation2 [shape = 'u8[32768]{0}', space=vmem, size = 0x8000, scoped, tag = 'input window, operand 0, single buffered']
    #allocation3 [shape = 's32[1]{0}', space=sflag, size = 0x4, scoped, tag = 'scoped memory for tpu_custom_call.1']
    #allocation4 [shape = 's32[1]{0}', space=sflag, size = 0x4, scoped, tag = 'scoped memory for tpu_custom_call.1']
    #allocation5 [shape = 'u8[32768]{0}', space=vmem, size = 0x8000, scoped, tag = 'input window, operand 1, single buffered']
    #allocation6 [shape = 's32[1]{0}', space=sflag, size = 0x4, scoped, tag = 'scoped memory for tpu_custom_call.1']
    #allocation7 [shape = 'u8[4096]{0}', space=vmem, size = 0x1000, scoped, tag = 'output window, operand 0, single buffered']
    %13 = vsyncpa [#allocation3], 0
    %14 = vsyncpa [#allocation6], 0
    %15 = vsyncpa [#allocation4], 0
    // Predicated region
    $region2: #{tpu_custom_call.1} parent=1 // pred_check
      _
    $region3: #{tpu_custom_call.1} parent=1 // pred_check_branch
      %17 = sbr.rel (0) target = $region5
    $region4: #{tpu_custom_call.1} parent=1 // pred_region
      %s19 = ssub.s32 1024, 1024
      %20 = vsyncadd [#allocation3], %s19
      %s21 = sshll.u32 [#allocation2], 4
      %s22 = int_to_ptr.vmem [resolvable:$true] %s21
      %27 = dma.hbm_to_vmem [thread:$0]  %s0, 1024, %s22, [#allocation3], 256, 256, 16
    $region5: #{tpu_custom_call.1} parent=1 // pred_fallthru
      _
    // Predicated region
    $region6: #{tpu_custom_call.1} parent=1 // pred_check
      _
    $region7: #{tpu_custom_call.1} parent=1 // pred_check_branch
      %29 = sbr.rel (0) target = $region9
    $region8: #{tpu_custom_call.1} parent=1 // pred_region
      %s31 = ssub.s32 1024, 1024
      %32 = vsyncadd [#allocation6], %s31
      %s33 = sshll.u32 [#allocation5], 4
      %s34 = int_to_ptr.vmem [resolvable:$true] %s33
      %39 = dma.hbm_to_vmem [thread:$0]  %s1, 1024, %s34, [#allocation6], 256, 256, 16
    $region9: #{tpu_custom_call.1} parent=1 // pred_fallthru
      _
    // Predicated region
    $region10: #{tpu_custom_call.1} parent=1 // pred_check
      _
    $region11: #{tpu_custom_call.1} parent=1 // pred_check_branch
      %41 = sbr.rel (0) target = $region13
    $region12: #{tpu_custom_call.1} parent=1 // pred_region
      _
    $region13: #{tpu_custom_call.1} parent=1 // pred_fallthru
      _
    // Predicated region
    $region14: #{tpu_custom_call.1} parent=1 // pred_check
      _
    $region15: #{tpu_custom_call.1} parent=1 // pred_check_branch
      %43 = sbr.rel (0) target = $region17
    $region16: #{tpu_custom_call.1} parent=1 // pred_region
      _
    $region17: #{tpu_custom_call.1} parent=1 // pred_fallthru
      _
    // Predicated region
    $region18: #{tpu_custom_call.1} parent=1 // pred_check
      _
    $region19: #{tpu_custom_call.1} parent=1 // pred_check_branch
      %45 = sbr.rel (0) target = $region21
    $region20: #{tpu_custom_call.1} parent=1 // pred_region
      _
    $region21: #{tpu_custom_call.1} parent=1 // pred_fallthru
      _
    // Predicated region
    $region22: #{tpu_custom_call.1} parent=1 // pred_check
      _
    $region23: #{tpu_custom_call.1} parent=1 // pred_check_branch
      %47 = sbr.rel (0) target = $region25
    $region24: #{tpu_custom_call.1} parent=1 // pred_region
      _
    $region25: #{tpu_custom_call.1} parent=1 // pred_fallthru
      _
    // Predicated region
    $region26: #{tpu_custom_call.1} parent=1 // pred_check
      _
    $region27: #{tpu_custom_call.1} parent=1 // pred_check_branch
      %49 = sbr.rel (0) target = $region29
    $region28: #{tpu_custom_call.1} parent=1 // pred_region
      _
    $region29: #{tpu_custom_call.1} parent=1 // pred_fallthru
      _
    // Predicated region
    $region30: #{tpu_custom_call.1} parent=1 // pred_check
      _
    $region31: #{tpu_custom_call.1} parent=1 // pred_check_branch
      %51 = sbr.rel (0) target = $region33
    $region32: #{tpu_custom_call.1} parent=1 // pred_region
      _
    $region33: #{tpu_custom_call.1} parent=1 // pred_fallthru
      _
    // Predicated region
    $region34: #{tpu_custom_call.1} parent=1 // pred_check
      _
    $region35: #{tpu_custom_call.1} parent=1 // pred_check_branch
      %53 = sbr.rel (0) target = $region37
    $region36: #{tpu_custom_call.1} parent=1 // pred_region
      %54 = dma.done [#allocation3], 1024
    $region37: #{tpu_custom_call.1} parent=1 // pred_fallthru
      _
    // Predicated region
    $region38: #{tpu_custom_call.1} parent=1 // pred_check
      _
    $region39: #{tpu_custom_call.1} parent=1 // pred_check_branch
      %56 = sbr.rel (0) target = $region41
    $region40: #{tpu_custom_call.1} parent=1 // pred_region
      %57 = dma.done [#allocation6], 1024
    $region41: #{tpu_custom_call.1} parent=1 // pred_fallthru
      _
    %v59 = vld [vmem:[#allocation2] sm:$0xff]
    %v60 = vld [vmem:[#allocation2 + $0x8] sm:$0xff]
    %v61 = vld [vmem:[#allocation2 + $0x10] sm:$0xff]
    %v62 = vld [vmem:[#allocation2 + $0x18] sm:$0xff]
    %v63 = vld [vmem:[#allocation2 + $0x20] sm:$0xff]
    %v64 = vld [vmem:[#allocation2 + $0x28] sm:$0xff]
    %v65 = vld [vmem:[#allocation2 + $0x30] sm:$0xff]
    %v66 = vld [vmem:[#allocation2 + $0x38] sm:$0xff]
    %v67 = vpack.c.bf16 %v61, %v59
    %v68 = vpack.c.bf16 %v62, %v60
    %v69 = vpack.c.bf16 %v65, %v63
    %v70 = vpack.c.bf16 %v66, %v64
    %v71 = vld [vmem:[#allocation5] sm:$0xff]
    %v72 = vld [vmem:[#allocation5 + $0x8] sm:$0xff]
    %v73 = vld [vmem:[#allocation5 + $0x10] sm:$0xff]
    %v74 = vld [vmem:[#allocation5 + $0x18] sm:$0xff]
    %v75 = vld [vmem:[#allocation5 + $0x20] sm:$0xff]
    %v76 = vld [vmem:[#allocation5 + $0x28] sm:$0xff]
    %v77 = vld [vmem:[#allocation5 + $0x30] sm:$0xff]
    %v78 = vld [vmem:[#allocation5 + $0x38] sm:$0xff]
    %v79 = vpack.c.bf16 %v73, %v71
    %v80 = vpack.c.bf16 %v74, %v72
    %v81 = vpack.c.bf16 %v77, %v75
    %v82 = vpack.c.bf16 %v78, %v76
    %v83 = vld [vmem:[%s3] sm:$0x77]
    %84 = vxpose.xlu0.c.b16.start [1/8] %v79, 128
    %85 = vxpose.xlu0.c.b16.cont [2/8] %v81, 128
    %86 = vxpose.xlu0.c.b16.cont [3/8] 0, 128
    %87 = vxpose.xlu0.c.b16.cont [4/8] 0, 128
    %88 = vxpose.xlu0.c.b16.cont [5/8] 0, 128
    %89 = vxpose.xlu0.c.b16.cont [6/8] 0, 128
    %90 = vxpose.xlu0.c.b16.cont [7/8] 0, 128
    %91 = vxpose.xlu0.c.b16.end [8/8] 0, 128
    %v92 = vpop.trf.xlu0
    %v93 = vpop.trf.xlu0
    %v94 = vpop.trf.xlu0
    %v95 = vpop.trf.xlu0
    %v96 = vpop.trf.xlu0
    %v97 = vpop.trf.xlu0
    %v98 = vpop.trf.xlu0
    %v99 = vpop.trf.xlu0
    %vm100 = vcmask 261120
    %v102 = vsel %vm100, %v92, 0
    %v105 = vsel %vm100, %v93, 0
    %v108 = vsel %vm100, %v94, 0
    %v111 = vsel %vm100, %v95, 0
    %v114 = vsel %vm100, %v96, 0
    %v117 = vsel %vm100, %v97, 0
    %v120 = vsel %vm100, %v98, 0
    %v123 = vsel %vm100, %v99, 0
    %125 = vmatprep.subr.bf16.mxu0 0
    %126 = vmatpush1.bf16.msra.mxu0 %v67
    %127 = vmatprep.subr.bf16.mxu0 0
    %128 = vmatpush1.bf16.msra.mxu0 %v69
    %129 = vmatprep.subr.bf16.mxu0 0
    %130 = vmatpush1.bf16.msra.mxu0 0
    %131 = vmatprep.subr.bf16.mxu0 0
    %132 = vmatpush1.bf16.msra.mxu0 0
    %133 = vmatprep.subr.bf16.mxu0 0
    %134 = vmatpush1.bf16.msra.mxu0 0
    %135 = vmatprep.subr.bf16.mxu0 0
    %136 = vmatpush1.bf16.msra.mxu0 0
    %137 = vmatprep.subr.bf16.mxu0 0
    %138 = vmatpush1.bf16.msra.mxu0 0
    %139 = vmatprep.subr.bf16.mxu0 0
    %140 = vmatpush1.bf16.msra.mxu0 0
    %141 = vmatprep.subr.bf16.mxu0 0
    %142 = vmatpush1.bf16.msra.mxu0 0
    %143 = vmatprep.subr.bf16.mxu0 0
    %144 = vmatpush1.bf16.msra.mxu0 0
    %145 = vmatprep.subr.bf16.mxu0 0
    %146 = vmatpush1.bf16.msra.mxu0 0
    %147 = vmatprep.subr.bf16.mxu0 0
    %148 = vmatpush1.bf16.msra.mxu0 0
    %149 = vmatprep.subr.bf16.mxu0 0
    %150 = vmatpush1.bf16.msra.mxu0 0
    %151 = vmatprep.subr.bf16.mxu0 0
    %152 = vmatpush1.bf16.msra.mxu0 0
    %153 = vmatprep.subr.bf16.mxu0 0
    %154 = vmatpush1.bf16.msra.mxu0 0
    %155 = vmatprep.subr.bf16.mxu0 0
    %156 = vmatpush1.bf16.msra.mxu0 0
    %157 = vmatprep.mubr.bf16.mxu0 0
    %158 = vmatmul.mubr.bf16.gmra.mrb[0].mxu0 %v102
    %v159 = vpop.f32.mrb[0].mxu0
    %v160 = vadd.f32 0.0, %v159
    %v161 = vpop.f32.mrb[0].mxu0
    %v162 = vpop.f32.mrb[0].mxu0
    %v163 = vadd.f32 0.0, %v162
    %v164 = vpop.f32.mrb[0].mxu0
    %165 = vmatprep.mubr.bf16.mxu0 0
    %166 = vmatmul.mubr.bf16.gmra.mrb[0].mxu0 %v105
    %v167 = vpop.f32.mrb[0].mxu0
    %v168 = vadd.f32 0.0, %v167
    %v169 = vpop.f32.mrb[0].mxu0
    %v170 = vpop.f32.mrb[0].mxu0
    %v171 = vadd.f32 0.0, %v170
    %v172 = vpop.f32.mrb[0].mxu0
    %173 = vmatprep.mubr.bf16.mxu0 0
    %174 = vmatmul.mubr.bf16.gmra.mrb[0].mxu0 %v108
    %v175 = vpop.f32.mrb[0].mxu0
    %v176 = vadd.f32 0.0, %v175
    %v177 = vpop.f32.mrb[0].mxu0
    %v178 = vpop.f32.mrb[0].mxu0
    %v179 = vadd.f32 0.0, %v178
    %v180 = vpop.f32.mrb[0].mxu0
    %181 = vmatprep.mubr.bf16.mxu0 0
    %182 = vmatmul.mubr.bf16.gmra.mrb[0].mxu0 %v111
    %v183 = vpop.f32.mrb[0].mxu0
    %v184 = vadd.f32 0.0, %v183
    %v185 = vpop.f32.mrb[0].mxu0
    %v186 = vpop.f32.mrb[0].mxu0
    %v187 = vadd.f32 0.0, %v186
    %v188 = vpop.f32.mrb[0].mxu0
    %189 = vmatprep.mubr.bf16.mxu0 0
    %190 = vmatmul.mubr.bf16.gmra.mrb[0].mxu0 %v114
    %v191 = vpop.f32.mrb[0].mxu0
    %v192 = vadd.f32 0.0, %v191
    %v193 = vpop.f32.mrb[0].mxu0
    %v194 = vpop.f32.mrb[0].mxu0
    %v195 = vadd.f32 0.0, %v194
    %v196 = vpop.f32.mrb[0].mxu0
    %197 = vmatprep.mubr.bf16.mxu0 0
    %198 = vmatmul.mubr.bf16.gmra.mrb[0].mxu0 %v117
    %v199 = vpop.f32.mrb[0].mxu0
    %v200 = vadd.f32 0.0, %v199
    %v201 = vpop.f32.mrb[0].mxu0
    %v202 = vpop.f32.mrb[0].mxu0
    %v203 = vadd.f32 0.0, %v202
    %v204 = vpop.f32.mrb[0].mxu0
    %205 = vmatprep.mubr.bf16.mxu0 0
    %206 = vmatmul.mubr.bf16.gmra.mrb[0].mxu0 %v120
    %v207 = vpop.f32.mrb[0].mxu0
    %v208 = vadd.f32 0.0, %v207
    %v209 = vpop.f32.mrb[0].mxu0
    %v210 = vpop.f32.mrb[0].mxu0
    %v211 = vadd.f32 0.0, %v210
    %v212 = vpop.f32.mrb[0].mxu0
    %213 = vmatprep.mubr.bf16.mxu0 0
    %214 = vmatmul.mubr.bf16.gmra.mrb[0].mxu0 %v123
    %v215 = vpop.f32.mrb[0].mxu0
    %v216 = vadd.f32 0.0, %v215
    %v217 = vpop.f32.mrb[0].mxu0
    %v218 = vpop.f32.mrb[0].mxu0
    %v219 = vadd.f32 0.0, %v218
    %v220 = vpop.f32.mrb[0].mxu0
    %221 = vdwg.mxu0
    %v222 = vmul.f32 %v160, 0.17677669
    %v223 = vmul.f32 %v163, 0.17677669
    %v224 = vmul.f32 %v168, 0.17677669
    %v225 = vmul.f32 %v171, 0.17677669
    %v226 = vmul.f32 %v176, 0.17677669
    %v227 = vmul.f32 %v179, 0.17677669
    %v228 = vmul.f32 %v184, 0.17677669
    %v229 = vmul.f32 %v187, 0.17677669
    %v230 = vmul.f32 %v192, 0.17677669
    %v231 = vmul.f32 %v195, 0.17677669
    %v232 = vmul.f32 %v200, 0.17677669
    %v233 = vmul.f32 %v203, 0.17677669
    %v234 = vmul.f32 %v208, 0.17677669
    %v235 = vmul.f32 %v211, 0.17677669
    %v236 = vmul.f32 %v216, 0.17677669
    %v237 = vmul.f32 %v219, 0.17677669
    %v238 = vmax.f32 %v222, %v226
    %v239 = vmax.f32 %v223, %v227
    %v240 = vmax.f32 %v224, %v228
    %v241 = vmax.f32 %v225, %v229
    %v242 = vmax.f32 %v238, %v230
    %v243 = vmax.f32 %v239, %v231
    %v244 = vmax.f32 %v240, %v232
    %v245 = vmax.f32 %v241, %v233
    %v246 = vmax.f32 %v242, %v234
    %v247 = vmax.f32 %v243, %v235
    %v248 = vmax.f32 %v244, %v236
    %v249 = vmax.f32 %v245, %v237
    %v250 = vmax.f32 %v246, %v247
    %v251 = vmax.f32 %v248, %v249
    %v252 = vmax.f32 %v250, %v251
    %v253 = vrot.slane %v252, 4
    %v254 = vmax.f32 %v252, %v253
    %v255 = vrot.slane %v254, 2
    %v256 = vmax.f32 %v254, %v255
    %v257 = vrot.slane %v256, 1
    %v258 = vmax.f32 %v256, %v257
    %v259 = vsub.f32 %v222, %v258
    %v260 = vsub.f32 %v223, %v258
    %v261 = vsub.f32 %v224, %v258
    %v262 = vsub.f32 %v225, %v258
    %v263 = vsub.f32 %v226, %v258
    %v264 = vsub.f32 %v227, %v258
    %v265 = vsub.f32 %v228, %v258
    %v266 = vsub.f32 %v229, %v258
    %v267 = vsub.f32 %v230, %v258
    %v268 = vsub.f32 %v231, %v258
    %v269 = vsub.f32 %v232, %v258
    %v270 = vsub.f32 %v233, %v258
    %v271 = vsub.f32 %v234, %v258
    %v272 = vsub.f32 %v235, %v258
    %v273 = vsub.f32 %v236, %v258
    %v274 = vsub.f32 %v237, %v258
    %v275 = vmul.f32 %v259, 1.442695
    %v276 = vpow.pop %v275
    %v277 = vmul.f32 %v260, 1.442695
    %v278 = vpow.pop %v277
    %v279 = vmul.f32 %v261, 1.442695
    %v280 = vpow.pop %v279
    %v281 = vmul.f32 %v262, 1.442695
    %v282 = vpow.pop %v281
    %v283 = vmul.f32 %v263, 1.442695
    %v284 = vpow.pop %v283
    %v285 = vmul.f32 %v264, 1.442695
    %v286 = vpow.pop %v285
    %v287 = vmul.f32 %v265, 1.442695
    %v288 = vpow.pop %v287
    %v289 = vmul.f32 %v266, 1.442695
    %v290 = vpow.pop %v289
    %v291 = vmul.f32 %v267, 1.442695
    %v292 = vpow.pop %v291
    %v293 = vmul.f32 %v268, 1.442695
    %v294 = vpow.pop %v293
    %v295 = vmul.f32 %v269, 1.442695
    %v296 = vpow.pop %v295
    %v297 = vmul.f32 %v270, 1.442695
    %v298 = vpow.pop %v297
    %v299 = vmul.f32 %v271, 1.442695
    %v300 = vpow.pop %v299
    %v301 = vmul.f32 %v272, 1.442695
    %v302 = vpow.pop %v301
    %v303 = vmul.f32 %v273, 1.442695
    %v304 = vpow.pop %v303
    %v305 = vmul.f32 %v274, 1.442695
    %v306 = vpow.pop %v305
    %v307 = vadd.f32 %v276, %v278
    %v308 = vadd.f32 %v307, %v280
    %v309 = vadd.f32 %v308, %v282
    %v310 = vadd.f32 %v309, %v284
    %v311 = vadd.f32 %v310, %v286
    %v312 = vadd.f32 %v311, %v288
    %v313 = vadd.f32 %v312, %v290
    %v314 = vadd.f32 %v313, %v292
    %v315 = vadd.f32 %v314, %v294
    %v316 = vadd.f32 %v315, %v296
    %v317 = vadd.f32 %v316, %v298
    %v318 = vadd.f32 %v317, %v300
    %v319 = vadd.f32 %v318, %v302
    %v320 = vadd.f32 %v319, %v304
    %v321 = vadd.f32 %v320, %v306
    %v322 = vrot.slane %v321, 4
    %v323 = vadd.f32 %v321, %v322
    %v324 = vrot.slane %v323, 2
    %v325 = vadd.f32 %v323, %v324
    %v326 = vrot.slane %v325, 1
    %v327 = vadd.f32 %v325, %v326
    %v328 = vrcp.pop %v327
    %v329 = vmul.f32 %v276, %v328
    %v330 = vmul.f32 %v278, %v328
    %v331 = vmul.f32 %v280, %v328
    %v332 = vmul.f32 %v282, %v328
    %v333 = vmul.f32 %v284, %v328
    %v334 = vmul.f32 %v286, %v328
    %v335 = vmul.f32 %v288, %v328
    %v336 = vmul.f32 %v290, %v328
    %v337 = vmul.f32 %v292, %v328
    %v338 = vmul.f32 %v294, %v328
    %v339 = vmul.f32 %v296, %v328
    %v340 = vmul.f32 %v298, %v328
    %v341 = vmul.f32 %v300, %v328
    %v342 = vmul.f32 %v302, %v328
    %v343 = vmul.f32 %v304, %v328
    %v344 = vmul.f32 %v306, %v328
    %345 = vmatprep.subr.mxu0 0.0
    %346 = vmatpush1.msra.mxu0 %v329
    %347 = vmatprep.subr.mxu0 0.0
    %348 = vmatpush1.msra.mxu0 %v330
    %349 = vmatprep.subr.mxu0 0.0
    %350 = vmatpush1.msra.mxu0 %v331
    %351 = vmatprep.subr.mxu0 0.0
    %352 = vmatpush1.msra.mxu0 %v332
    %353 = vmatprep.subr.mxu0 0.0
    %354 = vmatpush1.msra.mxu0 %v333
    %355 = vmatprep.subr.mxu0 0.0
    %356 = vmatpush1.msra.mxu0 %v334
    %357 = vmatprep.subr.mxu0 0.0
    %358 = vmatpush1.msra.mxu0 %v335
    %359 = vmatprep.subr.mxu0 0.0
    %360 = vmatpush1.msra.mxu0 %v336
    %361 = vmatprep.subr.mxu0 0.0
    %362 = vmatpush1.msra.mxu0 %v337
    %363 = vmatprep.subr.mxu0 0.0
    %364 = vmatpush1.msra.mxu0 %v338
    %365 = vmatprep.subr.mxu0 0.0
    %366 = vmatpush1.msra.mxu0 %v339
    %367 = vmatprep.subr.mxu0 0.0
    %368 = vmatpush1.msra.mxu0 %v340
    %369 = vmatprep.subr.mxu0 0.0
    %370 = vmatpush1.msra.mxu0 %v341
    %371 = vmatprep.subr.mxu0 0.0
    %372 = vmatpush1.msra.mxu0 %v342
    %373 = vmatprep.subr.mxu0 0.0
    %374 = vmatpush1.msra.mxu0 %v343
    %375 = vmatprep.subr.mxu0 0.0
    %376 = vmatpush1.msra.mxu0 %v344
    %377 = vmatprep.subr.mxu0 0.0
    %378 = vmatpush1.msra.mxu0 0.0
    %379 = vmatprep.subr.mxu0 0.0
    %380 = vmatpush1.msra.mxu0 0.0
    %381 = vmatprep.subr.mxu0 0.0
    %382 = vmatpush1.msra.mxu0 0.0
    %383 = vmatprep.subr.mxu0 0.0
    %384 = vmatpush1.msra.mxu0 0.0
    %385 = vmatprep.subr.mxu0 0.0
    %386 = vmatpush1.msra.mxu0 0.0
    %387 = vmatprep.subr.mxu0 0.0
    %388 = vmatpush1.msra.mxu0 0.0
    %389 = vmatprep.subr.mxu0 0.0
    %390 = vmatpush1.msra.mxu0 0.0
    %391 = vmatprep.subr.mxu0 0.0
    %392 = vmatpush1.msra.mxu0 0.0
    %393 = vmatprep.subr.mxu0 0.0
    %394 = vmatpush1.msra.mxu0 0.0
    %395 = vmatprep.subr.mxu0 0.0
    %396 = vmatpush1.msra.mxu0 0.0
    %397 = vmatprep.subr.mxu0 0.0
    %398 = vmatpush1.msra.mxu0 0.0
    %399 = vmatprep.subr.mxu0 0.0
    %400 = vmatpush1.msra.mxu0 0.0
    %401 = vmatprep.subr.mxu0 0.0
    %402 = vmatpush1.msra.mxu0 0.0
    %403 = vmatprep.subr.mxu0 0.0
    %404 = vmatpush1.msra.mxu0 0.0
    %405 = vmatprep.subr.mxu0 0.0
    %406 = vmatpush1.msra.mxu0 0.0
    %407 = vmatprep.subr.mxu0 0.0
    %408 = vmatpush1.msra.mxu0 0.0
    %409 = vmatprep.mubr.f32.mxu0 0.0
    %410 = vmatmul.mubr.f32.gmra.mrb[0].mxu0 %v83
    %v411 = vpop.f32.mrb[0].mxu0
    %v412 = vadd.f32 0.0, %v411
    %v413 = vpop.f32.mrb[0].mxu0
    %414 = vdwg.mxu0
    %415 = vxpose.xlu0.c.b16.start [1/8] %v80, 128
    %416 = vxpose.xlu0.c.b16.cont [2/8] %v82, 128
    %417 = vxpose.xlu0.c.b16.cont [3/8] 0, 128
    %418 = vxpose.xlu0.c.b16.cont [4/8] 0, 128
    %419 = vxpose.xlu0.c.b16.cont [5/8] 0, 128
    %420 = vxpose.xlu0.c.b16.cont [6/8] 0, 128
    %421 = vxpose.xlu0.c.b16.cont [7/8] 0, 128
    %422 = vxpose.xlu0.c.b16.end [8/8] 0, 128
    %v423 = vpop.trf.xlu0
    %v424 = vpop.trf.xlu0
    %v425 = vpop.trf.xlu0
    %v426 = vpop.trf.xlu0
    %v427 = vpop.trf.xlu0
    %v428 = vpop.trf.xlu0
    %v429 = vpop.trf.xlu0
    %v430 = vpop.trf.xlu0
    %v432 = vsel %vm100, %v423, 0
    %v435 = vsel %vm100, %v424, 0
    %v438 = vsel %vm100, %v425, 0
    %v441 = vsel %vm100, %v426, 0
    %v444 = vsel %vm100, %v427, 0
    %v447 = vsel %vm100, %v428, 0
    %v450 = vsel %vm100, %v429, 0
    %v453 = vsel %vm100, %v430, 0
    %455 = vmatprep.subr.bf16.mxu0 0
    %456 = vmatpush1.bf16.msra.mxu0 %v68
    %457 = vmatprep.subr.bf16.mxu0 0
    %458 = vmatpush1.bf16.msra.mxu0 %v70
    %459 = vmatprep.subr.bf16.mxu0 0
    %460 = vmatpush1.bf16.msra.mxu0 0
    %461 = vmatprep.subr.bf16.mxu0 0
    %462 = vmatpush1.bf16.msra.mxu0 0
    %463 = vmatprep.subr.bf16.mxu0 0
    %464 = vmatpush1.bf16.msra.mxu0 0
    %465 = vmatprep.subr.bf16.mxu0 0
    %466 = vmatpush1.bf16.msra.mxu0 0
    %467 = vmatprep.subr.bf16.mxu0 0
    %468 = vmatpush1.bf16.msra.mxu0 0
    %469 = vmatprep.subr.bf16.mxu0 0
    %470 = vmatpush1.bf16.msra.mxu0 0
    %471 = vmatprep.subr.bf16.mxu0 0
    %472 = vmatpush1.bf16.msra.mxu0 0
    %473 = vmatprep.subr.bf16.mxu0 0
    %474 = vmatpush1.bf16.msra.mxu0 0
    %475 = vmatprep.subr.bf16.mxu0 0
    %476 = vmatpush1.bf16.msra.mxu0 0
    %477 = vmatprep.subr.bf16.mxu0 0
    %478 = vmatpush1.bf16.msra.mxu0 0
    %479 = vmatprep.subr.bf16.mxu0 0
    %480 = vmatpush1.bf16.msra.mxu0 0
    %481 = vmatprep.subr.bf16.mxu0 0
    %482 = vmatpush1.bf16.msra.mxu0 0
    %483 = vmatprep.subr.bf16.mxu0 0
    %484 = vmatpush1.bf16.msra.mxu0 0
    %485 = vmatprep.subr.bf16.mxu0 0
    %486 = vmatpush1.bf16.msra.mxu0 0
    %487 = vmatprep.mubr.bf16.mxu0 0
    %488 = vmatmul.mubr.bf16.gmra.mrb[0].mxu0 %v432
    %v489 = vpop.f32.mrb[0].mxu0
    %v490 = vadd.f32 0.0, %v489
    %v491 = vpop.f32.mrb[0].mxu0
    %v492 = vpop.f32.mrb[0].mxu0
    %v493 = vadd.f32 0.0, %v492
    %v494 = vpop.f32.mrb[0].mxu0
    %495 = vmatprep.mubr.bf16.mxu0 0
    %496 = vmatmul.mubr.bf16.gmra.mrb[0].mxu0 %v435
    %v497 = vpop.f32.mrb[0].mxu0
    %v498 = vadd.f32 0.0, %v497
    %v499 = vpop.f32.mrb[0].mxu0
    %v500 = vpop.f32.mrb[0].mxu0
    %v501 = vadd.f32 0.0, %v500
    %v502 = vpop.f32.mrb[0].mxu0
    %503 = vmatprep.mubr.bf16.mxu0 0
    %504 = vmatmul.mubr.bf16.gmra.mrb[0].mxu0 %v438
    %v505 = vpop.f32.mrb[0].mxu0
    %v506 = vadd.f32 0.0, %v505
    %v507 = vpop.f32.mrb[0].mxu0
    %v508 = vpop.f32.mrb[0].mxu0
    %v509 = vadd.f32 0.0, %v508
    %v510 = vpop.f32.mrb[0].mxu0
    %511 = vmatprep.mubr.bf16.mxu0 0
    %512 = vmatmul.mubr.bf16.gmra.mrb[0].mxu0 %v441
    %v513 = vpop.f32.mrb[0].mxu0
    %v514 = vadd.f32 0.0, %v513
    %v515 = vpop.f32.mrb[0].mxu0
    %v516 = vpop.f32.mrb[0].mxu0
    %v517 = vadd.f32 0.0, %v516
    %v518 = vpop.f32.mrb[0].mxu0
    %519 = vmatprep.mubr.bf16.mxu0 0
    %520 = vmatmul.mubr.bf16.gmra.mrb[0].mxu0 %v444
    %v521 = vpop.f32.mrb[0].mxu0
    %v522 = vadd.f32 0.0, %v521
    %v523 = vpop.f32.mrb[0].mxu0
    %v524 = vpop.f32.mrb[0].mxu0
    %v525 = vadd.f32 0.0, %v524
    %v526 = vpop.f32.mrb[0].mxu0
    %527 = vmatprep.mubr.bf16.mxu0 0
    %528 = vmatmul.mubr.bf16.gmra.mrb[0].mxu0 %v447
    %v529 = vpop.f32.mrb[0].mxu0
    %v530 = vadd.f32 0.0, %v529
    %v531 = vpop.f32.mrb[0].mxu0
    %v532 = vpop.f32.mrb[0].mxu0
    %v533 = vadd.f32 0.0, %v532
    %v534 = vpop.f32.mrb[0].mxu0
    %535 = vmatprep.mubr.bf16.mxu0 0
    %536 = vmatmul.mubr.bf16.gmra.mrb[0].mxu0 %v450
    %v537 = vpop.f32.mrb[0].mxu0
    %v538 = vadd.f32 0.0, %v537
    %v539 = vpop.f32.mrb[0].mxu0
    %v540 = vpop.f32.mrb[0].mxu0
    %v541 = vadd.f32 0.0, %v540
    %v542 = vpop.f32.mrb[0].mxu0
    %543 = vmatprep.mubr.bf16.mxu0 0
    %544 = vmatmul.mubr.bf16.gmra.mrb[0].mxu0 %v453
    %v545 = vpop.f32.mrb[0].mxu0
    %v546 = vadd.f32 0.0, %v545
    %v547 = vpop.f32.mrb[0].mxu0
    %v548 = vpop.f32.mrb[0].mxu0
    %v549 = vadd.f32 0.0, %v548
    %v550 = vpop.f32.mrb[0].mxu0
    %551 = vdwg.mxu0
    %v552 = vmul.f32 %v490, 0.17677669
    %v553 = vmul.f32 %v493, 0.17677669
    %v554 = vmul.f32 %v498, 0.17677669
    %v555 = vmul.f32 %v501, 0.17677669
    %v556 = vmul.f32 %v506, 0.17677669
    %v557 = vmul.f32 %v509, 0.17677669
    %v558 = vmul.f32 %v514, 0.17677669
    %v559 = vmul.f32 %v517, 0.17677669
    %v560 = vmul.f32 %v522, 0.17677669
    %v561 = vmul.f32 %v525, 0.17677669
    %v562 = vmul.f32 %v530, 0.17677669
    %v563 = vmul.f32 %v533, 0.17677669
    %v564 = vmul.f32 %v538, 0.17677669
    %v565 = vmul.f32 %v541, 0.17677669
    %v566 = vmul.f32 %v546, 0.17677669
    %v567 = vmul.f32 %v549, 0.17677669
    %v568 = vmax.f32 %v552, %v556
    %v569 = vmax.f32 %v553, %v557
    %v570 = vmax.f32 %v554, %v558
    %v571 = vmax.f32 %v555, %v559
    %v572 = vmax.f32 %v568, %v560
    %v573 = vmax.f32 %v569, %v561
    %v574 = vmax.f32 %v570, %v562
    %v575 = vmax.f32 %v571, %v563
    %v576 = vmax.f32 %v572, %v564
    %v577 = vmax.f32 %v573, %v565
    %v578 = vmax.f32 %v574, %v566
    %v579 = vmax.f32 %v575, %v567
    %v580 = vmax.f32 %v576, %v577
    %v581 = vmax.f32 %v578, %v579
    %v582 = vmax.f32 %v580, %v581
    %v583 = vrot.slane %v582, 4
    %v584 = vmax.f32 %v582, %v583
    %v585 = vrot.slane %v584, 2
    %v586 = vmax.f32 %v584, %v585
    %v587 = vrot.slane %v586, 1
    %v588 = vmax.f32 %v586, %v587
    %v589 = vsub.f32 %v552, %v588
    %v590 = vsub.f32 %v553, %v588
    %v591 = vsub.f32 %v554, %v588
    %v592 = vsub.f32 %v555, %v588
    %v593 = vsub.f32 %v556, %v588
    %v594 = vsub.f32 %v557, %v588
    %v595 = vsub.f32 %v558, %v588
    %v596 = vsub.f32 %v559, %v588
    %v597 = vsub.f32 %v560, %v588
    %v598 = vsub.f32 %v561, %v588
    %v599 = vsub.f32 %v562, %v588
    %v600 = vsub.f32 %v563, %v588
    %v601 = vsub.f32 %v564, %v588
    %v602 = vsub.f32 %v565, %v588
    %v603 = vsub.f32 %v566, %v588
    %v604 = vsub.f32 %v567, %v588
    %v605 = vmul.f32 %v589, 1.442695
    %v606 = vpow.pop %v605
    %v607 = vmul.f32 %v590, 1.442695
    %v608 = vpow.pop %v607
    %v609 = vmul.f32 %v591, 1.442695
    %v610 = vpow.pop %v609
    %v611 = vmul.f32 %v592, 1.442695
    %v612 = vpow.pop %v611
    %v613 = vmul.f32 %v593, 1.442695
    %v614 = vpow.pop %v613
    %v615 = vmul.f32 %v594, 1.442695
    %v616 = vpow.pop %v615
    %v617 = vmul.f32 %v595, 1.442695
    %v618 = vpow.pop %v617
    %v619 = vmul.f32 %v596, 1.442695
    %v620 = vpow.pop %v619
    %v621 = vmul.f32 %v597, 1.442695
    %v622 = vpow.pop %v621
    %v623 = vmul.f32 %v598, 1.442695
    %v624 = vpow.pop %v623
    %v625 = vmul.f32 %v599, 1.442695
    %v626 = vpow.pop %v625
    %v627 = vmul.f32 %v600, 1.442695
    %v628 = vpow.pop %v627
    %v629 = vmul.f32 %v601, 1.442695
    %v630 = vpow.pop %v629
    %v631 = vmul.f32 %v602, 1.442695
    %v632 = vpow.pop %v631
    %v633 = vmul.f32 %v603, 1.442695
    %v634 = vpow.pop %v633
    %v635 = vmul.f32 %v604, 1.442695
    %v636 = vpow.pop %v635
    %v637 = vadd.f32 %v606, %v608
    %v638 = vadd.f32 %v637, %v610
    %v639 = vadd.f32 %v638, %v612
    %v640 = vadd.f32 %v639, %v614
    %v641 = vadd.f32 %v640, %v616
    %v642 = vadd.f32 %v641, %v618
    %v643 = vadd.f32 %v642, %v620
    %v644 = vadd.f32 %v643, %v622
    %v645 = vadd.f32 %v644, %v624
    %v646 = vadd.f32 %v645, %v626
    %v647 = vadd.f32 %v646, %v628
    %v648 = vadd.f32 %v647, %v630
    %v649 = vadd.f32 %v648, %v632
    %v650 = vadd.f32 %v649, %v634
    %v651 = vadd.f32 %v650, %v636
    %v652 = vrot.slane %v651, 4
    %v653 = vadd.f32 %v651, %v652
    %v654 = vrot.slane %v653, 2
    %v655 = vadd.f32 %v653, %v654
    %v656 = vrot.slane %v655, 1
    %v657 = vadd.f32 %v655, %v656
    %v658 = vrcp.pop %v657
    %v659 = vmul.f32 %v606, %v658
    %v660 = vmul.f32 %v608, %v658
    %v661 = vmul.f32 %v610, %v658
    %v662 = vmul.f32 %v612, %v658
    %v663 = vmul.f32 %v614, %v658
    %v664 = vmul.f32 %v616, %v658
    %v665 = vmul.f32 %v618, %v658
    %v666 = vmul.f32 %v620, %v658
    %v667 = vmul.f32 %v622, %v658
    %v668 = vmul.f32 %v624, %v658
    %v669 = vmul.f32 %v626, %v658
    %v670 = vmul.f32 %v628, %v658
    %v671 = vmul.f32 %v630, %v658
    %v672 = vmul.f32 %v632, %v658
    %v673 = vmul.f32 %v634, %v658
    %v674 = vmul.f32 %v636, %v658
    %v676 = vcombine.high %v83, %v83
    %678 = vmatprep.subr.mxu0 0.0
    %679 = vmatpush1.msra.mxu0 %v659
    %680 = vmatprep.subr.mxu0 0.0
    %681 = vmatpush1.msra.mxu0 %v660
    %682 = vmatprep.subr.mxu0 0.0
    %683 = vmatpush1.msra.mxu0 %v661
    %684 = vmatprep.subr.mxu0 0.0
    %685 = vmatpush1.msra.mxu0 %v662
    %686 = vmatprep.subr.mxu0 0.0
    %687 = vmatpush1.msra.mxu0 %v663
    %688 = vmatprep.subr.mxu0 0.0
    %689 = vmatpush1.msra.mxu0 %v664
    %690 = vmatprep.subr.mxu0 0.0
    %691 = vmatpush1.msra.mxu0 %v665
    %692 = vmatprep.subr.mxu0 0.0
    %693 = vmatpush1.msra.mxu0 %v666
    %694 = vmatprep.subr.mxu0 0.0
    %695 = vmatpush1.msra.mxu0 %v667
    %696 = vmatprep.subr.mxu0 0.0
    %697 = vmatpush1.msra.mxu0 %v668
    %698 = vmatprep.subr.mxu0 0.0
    %699 = vmatpush1.msra.mxu0 %v669
    %700 = vmatprep.subr.mxu0 0.0
    %701 = vmatpush1.msra.mxu0 %v670
    %702 = vmatprep.subr.mxu0 0.0
    %703 = vmatpush1.msra.mxu0 %v671
    %704 = vmatprep.subr.mxu0 0.0
    %705 = vmatpush1.msra.mxu0 %v672
    %706 = vmatprep.subr.mxu0 0.0
    %707 = vmatpush1.msra.mxu0 %v673
    %708 = vmatprep.subr.mxu0 0.0
    %709 = vmatpush1.msra.mxu0 %v674
    %710 = vmatprep.subr.mxu0 0.0
    %711 = vmatpush1.msra.mxu0 0.0
    %712 = vmatprep.subr.mxu0 0.0
    %713 = vmatpush1.msra.mxu0 0.0
    %714 = vmatprep.subr.mxu0 0.0
    %715 = vmatpush1.msra.mxu0 0.0
    %716 = vmatprep.subr.mxu0 0.0
    %717 = vmatpush1.msra.mxu0 0.0
    %718 = vmatprep.subr.mxu0 0.0
    %719 = vmatpush1.msra.mxu0 0.0
    %720 = vmatprep.subr.mxu0 0.0
    %721 = vmatpush1.msra.mxu0 0.0
    %722 = vmatprep.subr.mxu0 0.0
    %723 = vmatpush1.msra.mxu0 0.0
    %724 = vmatprep.subr.mxu0 0.0
    %725 = vmatpush1.msra.mxu0 0.0
    %726 = vmatprep.subr.mxu0 0.0
    %727 = vmatpush1.msra.mxu0 0.0
    %728 = vmatprep.subr.mxu0 0.0
    %729 = vmatpush1.msra.mxu0 0.0
    %730 = vmatprep.subr.mxu0 0.0
    %731 = vmatpush1.msra.mxu0 0.0
    %732 = vmatprep.subr.mxu0 0.0
    %733 = vmatpush1.msra.mxu0 0.0
    %734 = vmatprep.subr.mxu0 0.0
    %735 = vmatpush1.msra.mxu0 0.0
    %736 = vmatprep.subr.mxu0 0.0
    %737 = vmatpush1.msra.mxu0 0.0
    %738 = vmatprep.subr.mxu0 0.0
    %739 = vmatpush1.msra.mxu0 0.0
    %740 = vmatprep.subr.mxu0 0.0
    %741 = vmatpush1.msra.mxu0 0.0
    %742 = vmatprep.mubr.f32.mxu0 0.0
    %743 = vmatmul.mubr.f32.gmra.mrb[0].mxu0 %v676
    %v744 = vpop.f32.mrb[0].mxu0
    %v745 = vadd.f32 0.0, %v744
    %v746 = vpop.f32.mrb[0].mxu0
    %747 = vdwg.mxu0
    %v748 = vlaneseq
    %v749 = vshrl.u32 %v748, 7
    %v750 = vadd.s32 %v749, 8
    %vm751 = vcmp.eq.s32.totalorder %v749, 0
    %vm752 = vcmp.eq.s32.totalorder %v750, 0
    %v753 = vsel %vm751, 1.0, 0.0
    %v754 = vsel %vm752, 1.0, 0.0
    %v755 = vld [vmem:[%s4] sm:$0xf]
    %v756 = vld [vmem:[%s4 + $0x4] sm:$0xf]
    %v757 = vld [vmem:[%s4 + $0x8] sm:$0xf]
    %v758 = vld [vmem:[%s4 + $0xc] sm:$0xf]
    %v759 = vld [vmem:[%s4 + $0x10] sm:$0xf]
    %v760 = vld [vmem:[%s4 + $0x14] sm:$0xf]
    %v761 = vld [vmem:[%s4 + $0x18] sm:$0xf]
    %v762 = vld [vmem:[%s4 + $0x1c] sm:$0xf]
    %v763 = vld [vmem:[%s4 + $0x20] sm:$0xf]
    %v764 = vld [vmem:[%s4 + $0x24] sm:$0xf]
    %v765 = vld [vmem:[%s4 + $0x28] sm:$0xf]
    %v766 = vld [vmem:[%s4 + $0x2c] sm:$0xf]
    %v767 = vld [vmem:[%s4 + $0x30] sm:$0xf]
    %v768 = vld [vmem:[%s4 + $0x34] sm:$0xf]
    %v769 = vpack.c.bf16 %v754, %v753
    %v784 = vunpack.c.l.b16 %v755
    %v785 = vunpack.c.l.b16 %v756
    %v786 = vunpack.c.l.b16 %v757
    %v787 = vunpack.c.l.b16 %v758
    %v788 = vunpack.c.l.b16 %v759
    %v789 = vunpack.c.l.b16 %v760
    %v790 = vunpack.c.l.b16 %v761
    %v791 = vunpack.c.l.b16 %v762
    %v792 = vunpack.c.l.b16 %v763
    %v793 = vunpack.c.l.b16 %v764
    %v794 = vunpack.c.l.b16 %v765
    %v795 = vunpack.c.l.b16 %v766
    %v796 = vunpack.c.l.b16 %v767
    %v797 = vunpack.c.l.b16 %v768
    %v798 = vpack.c.b16 %v785, %v784
    %v799 = vpack.c.b16 %v787, %v786
    %v800 = vpack.c.b16 %v789, %v788
    %v801 = vpack.c.b16 %v791, %v790
    %v802 = vpack.c.b16 %v793, %v792
    %v803 = vpack.c.b16 %v795, %v794
    %v804 = vpack.c.b16 %v797, %v796
    %vm805 = vcmask 392192
    %v807 = vsel %vm805, %v798, 0
    %v810 = vsel %vm805, %v799, 0
    %v813 = vsel %vm805, %v800, 0
    %v816 = vsel %vm805, %v801, 0
    %v819 = vsel %vm805, %v802, 0
    %v822 = vsel %vm805, %v803, 0
    %v825 = vsel %vm805, %v804, 0
    %827 = vmatprep.subr.bf16.mxu0 %v68
    %828 = vmatpush1.bf16.msra.mxu0 %v67
    %829 = vmatprep.subr.bf16.mxu0 %v70
    %830 = vmatpush1.bf16.msra.mxu0 %v69
    %831 = vmatprep.subr.bf16.mxu0 %v769
    %832 = vmatpush1.bf16.msra.mxu0 %v769
    %833 = vmatprep.subr.bf16.mxu0 0
    %834 = vmatpush1.bf16.msra.mxu0 0
    %835 = vmatprep.subr.bf16.mxu0 0
    %836 = vmatpush1.bf16.msra.mxu0 0
    %837 = vmatprep.subr.bf16.mxu0 0
    %838 = vmatpush1.bf16.msra.mxu0 0
    %839 = vmatprep.subr.bf16.mxu0 0
    %840 = vmatpush1.bf16.msra.mxu0 0
    %841 = vmatprep.subr.bf16.mxu0 0
    %842 = vmatpush1.bf16.msra.mxu0 0
    %843 = vmatprep.subr.bf16.mxu0 0
    %844 = vmatpush1.bf16.msra.mxu0 0
    %845 = vmatprep.subr.bf16.mxu0 0
    %846 = vmatpush1.bf16.msra.mxu0 0
    %847 = vmatprep.subr.bf16.mxu0 0
    %848 = vmatpush1.bf16.msra.mxu0 0
    %849 = vmatprep.subr.bf16.mxu0 0
    %850 = vmatpush1.bf16.msra.mxu0 0
    %851 = vmatprep.subr.bf16.mxu0 0
    %852 = vmatpush1.bf16.msra.mxu0 0
    %853 = vmatprep.subr.bf16.mxu0 0
    %854 = vmatpush1.bf16.msra.mxu0 0
    %855 = vmatprep.subr.bf16.mxu0 0
    %856 = vmatpush1.bf16.msra.mxu0 0
    %857 = vmatprep.subr.bf16.mxu0 0
    %858 = vmatpush1.bf16.msra.mxu0 0
    %859 = vmatprep.mubr.bf16.mxu0 0
    %860 = vmatmul.mubr.bf16.gmra.mrb[0].mxu0 %v807
    %v861 = vpop.f32.mrb[0].mxu0
    %v862 = vadd.f32 0.0, %v861
    %v863 = vpop.f32.mrb[0].mxu0
    %v864 = vadd.f32 0.0, %v863
    %v865 = vpop.f32.mrb[0].mxu0
    %v866 = vadd.f32 0.0, %v865
    %v867 = vpop.f32.mrb[0].mxu0
    %v868 = vadd.f32 0.0, %v867
    %869 = vmatprep.mubr.bf16.mxu0 0
    %870 = vmatmul.mubr.bf16.gmra.mrb[0].mxu0 %v810
    %v871 = vpop.f32.mrb[0].mxu0
    %v872 = vadd.f32 0.0, %v871
    %v873 = vpop.f32.mrb[0].mxu0
    %v874 = vadd.f32 0.0, %v873
    %v875 = vpop.f32.mrb[0].mxu0
    %v876 = vadd.f32 0.0, %v875
    %v877 = vpop.f32.mrb[0].mxu0
    %v878 = vadd.f32 0.0, %v877
    %879 = vmatprep.mubr.bf16.mxu0 0
    %880 = vmatmul.mubr.bf16.gmra.mrb[0].mxu0 %v813
    %v881 = vpop.f32.mrb[0].mxu0
    %v882 = vadd.f32 0.0, %v881
    %v883 = vpop.f32.mrb[0].mxu0
    %v884 = vadd.f32 0.0, %v883
    %v885 = vpop.f32.mrb[0].mxu0
    %v886 = vadd.f32 0.0, %v885
    %v887 = vpop.f32.mrb[0].mxu0
    %v888 = vadd.f32 0.0, %v887
    %889 = vmatprep.mubr.bf16.mxu0 0
    %890 = vmatmul.mubr.bf16.gmra.mrb[0].mxu0 %v816
    %v891 = vpop.f32.mrb[0].mxu0
    %v892 = vadd.f32 0.0, %v891
    %v893 = vpop.f32.mrb[0].mxu0
    %v894 = vadd.f32 0.0, %v893
    %v895 = vpop.f32.mrb[0].mxu0
    %v896 = vadd.f32 0.0, %v895
    %v897 = vpop.f32.mrb[0].mxu0
    %v898 = vadd.f32 0.0, %v897
    %899 = vmatprep.mubr.bf16.mxu0 0
    %900 = vmatmul.mubr.bf16.gmra.mrb[0].mxu0 %v819
    %v901 = vpop.f32.mrb[0].mxu0
    %v902 = vadd.f32 0.0, %v901
    %v903 = vpop.f32.mrb[0].mxu0
    %v904 = vadd.f32 0.0, %v903
    %v905 = vpop.f32.mrb[0].mxu0
    %v906 = vadd.f32 0.0, %v905
    %v907 = vpop.f32.mrb[0].mxu0
    %v908 = vadd.f32 0.0, %v907
    %909 = vmatprep.mubr.bf16.mxu0 0
    %910 = vmatmul.mubr.bf16.gmra.mrb[0].mxu0 %v822
    %v911 = vpop.f32.mrb[0].mxu0
    %v912 = vadd.f32 0.0, %v911
    %v913 = vpop.f32.mrb[0].mxu0
    %v914 = vadd.f32 0.0, %v913
    %v915 = vpop.f32.mrb[0].mxu0
    %v916 = vadd.f32 0.0, %v915
    %v917 = vpop.f32.mrb[0].mxu0
    %v918 = vadd.f32 0.0, %v917
    %919 = vmatprep.mubr.bf16.mxu0 0
    %920 = vmatmul.mubr.bf16.gmra.mrb[0].mxu0 %v825
    %v921 = vpop.f32.mrb[0].mxu0
    %v922 = vadd.f32 0.0, %v921
    %v923 = vpop.f32.mrb[0].mxu0
    %v924 = vadd.f32 0.0, %v923
    %v925 = vpop.f32.mrb[0].mxu0
    %v926 = vadd.f32 0.0, %v925
    %v927 = vpop.f32.mrb[0].mxu0
    %v928 = vadd.f32 0.0, %v927
    %929 = vdwg.mxu0
    %v930 = vmax.f32 %v862, 0.0
    %v931 = vmax.f32 %v864, 0.0
    %v932 = vmax.f32 %v866, 0.0
    %v933 = vmax.f32 %v868, 0.0
    %v934 = vmax.f32 %v872, 0.0
    %v935 = vmax.f32 %v874, 0.0
    %v936 = vmax.f32 %v876, 0.0
    %v937 = vmax.f32 %v878, 0.0
    %v938 = vmax.f32 %v882, 0.0
    %v939 = vmax.f32 %v884, 0.0
    %v940 = vmax.f32 %v886, 0.0
    %v941 = vmax.f32 %v888, 0.0
    %v942 = vmax.f32 %v892, 0.0
    %v943 = vmax.f32 %v894, 0.0
    %v944 = vmax.f32 %v896, 0.0
    %v945 = vmax.f32 %v898, 0.0
    %v946 = vmax.f32 %v902, 0.0
    %v947 = vmax.f32 %v904, 0.0
    %v948 = vmax.f32 %v906, 0.0
    %v949 = vmax.f32 %v908, 0.0
    %v950 = vmax.f32 %v912, 0.0
    %v951 = vmax.f32 %v914, 0.0
    %v952 = vmax.f32 %v916, 0.0
    %v953 = vmax.f32 %v918, 0.0
    %v954 = vmax.f32 %v922, 0.0
    %v955 = vmax.f32 %v924, 0.0
    %v956 = vmax.f32 %v926, 0.0
    %v957 = vmax.f32 %v928, 0.0
    %v958 = vld [vmem:[%s4 + $0x38] sm:$0xf]
    %v959 = vld [vmem:[%s4 + $0x3c] sm:$0xf]
    %v960 = vpack.c.bf16 %v932, %v930
    %v961 = vpack.c.bf16 %v933, %v931
    %v962 = vpack.c.bf16 %v936, %v934
    %v963 = vpack.c.bf16 %v937, %v935
    %v966 = vunpack.c.l.b16 %v958
    %v967 = vunpack.c.l.b16 %v959
    %v968 = vpack.c.b16 %v967, %v966
    %v970 = vsel %vm100, %v968, 0
    %972 = vmatprep.subr.bf16.mxu0 %v961
    %973 = vmatpush1.bf16.msra.mxu0 %v960
    %974 = vmatprep.subr.bf16.mxu0 %v963
    %975 = vmatpush1.bf16.msra.mxu0 %v962
    %976 = vmatprep.subr.bf16.mxu0 0
    %977 = vmatpush1.bf16.msra.mxu0 0
    %978 = vmatprep.subr.bf16.mxu0 0
    %979 = vmatpush1.bf16.msra.mxu0 0
    %980 = vmatprep.subr.bf16.mxu0 0
    %981 = vmatpush1.bf16.msra.mxu0 0
    %982 = vmatprep.subr.bf16.mxu0 0
    %983 = vmatpush1.bf16.msra.mxu0 0
    %984 = vmatprep.subr.bf16.mxu0 0
    %985 = vmatpush1.bf16.msra.mxu0 0
    %986 = vmatprep.subr.bf16.mxu0 0
    %987 = vmatpush1.bf16.msra.mxu0 0
    %988 = vmatprep.subr.bf16.mxu0 0
    %989 = vmatpush1.bf16.msra.mxu0 0
    %990 = vmatprep.subr.bf16.mxu0 0
    %991 = vmatpush1.bf16.msra.mxu0 0
    %992 = vmatprep.subr.bf16.mxu0 0
    %993 = vmatpush1.bf16.msra.mxu0 0
    %994 = vmatprep.subr.bf16.mxu0 0
    %995 = vmatpush1.bf16.msra.mxu0 0
    %996 = vmatprep.subr.bf16.mxu0 0
    %997 = vmatpush1.bf16.msra.mxu0 0
    %998 = vmatprep.subr.bf16.mxu0 0
    %999 = vmatpush1.bf16.msra.mxu0 0
    %1000 = vmatprep.subr.bf16.mxu0 0
    %1001 = vmatpush1.bf16.msra.mxu0 0
    %1002 = vmatprep.subr.bf16.mxu0 0
    %1003 = vmatpush1.bf16.msra.mxu0 0
    %1004 = vmatprep.mubr.bf16.mxu0 0
    %1005 = vmatmul.mubr.bf16.gmra.mrb[0].mxu0 %v970
    %v1006 = vpop.f32.mrb[0].mxu0
    %v1007 = vadd.f32 0.0, %v1006
    %v1008 = vpop.f32.mrb[0].mxu0
    %v1009 = vadd.f32 0.0, %v1008
    %v1010 = vpop.f32.mrb[0].mxu0
    %v1011 = vadd.f32 0.0, %v1010
    %v1012 = vpop.f32.mrb[0].mxu0
    %v1013 = vadd.f32 0.0, %v1012
    %1014 = vdwg.mxu0
    %v1015 = vmax.f32 %v1007, 0.0
    %v1016 = vmax.f32 %v1009, 0.0
    %v1017 = vmax.f32 %v1011, 0.0
    %v1018 = vmax.f32 %v1013, 0.0
    %v1019 = vld [vmem:[%s4 + $0x40] sm:$0xf]
    %v1020 = vld [vmem:[%s4 + $0x44] sm:$0xf]
    %v1021 = vpack.c.bf16 %v1017, %v1015
    %v1022 = vpack.c.bf16 %v1018, %v1016
    %v1025 = vunpack.c.l.b16 %v1019
    %v1026 = vunpack.c.l.b16 %v1020
    %v1027 = vpack.c.b16 %v1026, %v1025
    %vm1028 = vcmask 130048
    %v1030 = vsel %vm1028, %v1027, 0
    %1032 = vmatprep.subr.bf16.mxu0 %v1022
    %1033 = vmatpush1.bf16.msra.mxu0 %v1021
    %1034 = vmatprep.subr.bf16.mxu0 0
    %1035 = vmatpush1.bf16.msra.mxu0 0
    %1036 = vmatprep.subr.bf16.mxu0 0
    %1037 = vmatpush1.bf16.msra.mxu0 0
    %1038 = vmatprep.subr.bf16.mxu0 0
    %1039 = vmatpush1.bf16.msra.mxu0 0
    %1040 = vmatprep.subr.bf16.mxu0 0
    %1041 = vmatpush1.bf16.msra.mxu0 0
    %1042 = vmatprep.subr.bf16.mxu0 0
    %1043 = vmatpush1.bf16.msra.mxu0 0
    %1044 = vmatprep.subr.bf16.mxu0 0
    %1045 = vmatpush1.bf16.msra.mxu0 0
    %1046 = vmatprep.subr.bf16.mxu0 0
    %1047 = vmatpush1.bf16.msra.mxu0 0
    %1048 = vmatprep.subr.bf16.mxu0 0
    %1049 = vmatpush1.bf16.msra.mxu0 0
    %1050 = vmatprep.subr.bf16.mxu0 0
    %1051 = vmatpush1.bf16.msra.mxu0 0
    %1052 = vmatprep.subr.bf16.mxu0 0
    %1053 = vmatpush1.bf16.msra.mxu0 0
    %1054 = vmatprep.subr.bf16.mxu0 0
    %1055 = vmatpush1.bf16.msra.mxu0 0
    %1056 = vmatprep.subr.bf16.mxu0 0
    %1057 = vmatpush1.bf16.msra.mxu0 0
    %1058 = vmatprep.subr.bf16.mxu0 0
    %1059 = vmatpush1.bf16.msra.mxu0 0
    %1060 = vmatprep.subr.bf16.mxu0 0
    %1061 = vmatpush1.bf16.msra.mxu0 0
    %1062 = vmatprep.subr.bf16.mxu0 0
    %1063 = vmatpush1.bf16.msra.mxu0 0
    %1064 = vmatprep.mubr.bf16.mxu0 0
    %1065 = vmatmul.mubr.bf16.gmra.mrb[0].mxu0 %v1030
    %v1066 = vpop.f32.mrb[0].mxu0
    %v1067 = vadd.f32 0.0, %v1066
    %v1068 = vpop.f32.mrb[0].mxu0
    %v1069 = vadd.f32 0.0, %v1068
    %v1070 = vpop.f32.mrb[0].mxu0
    %v1071 = vadd.f32 0.0, %v1070
    %v1072 = vpop.f32.mrb[0].mxu0
    %v1073 = vadd.f32 0.0, %v1072
    %1074 = vdwg.mxu0
    %v1075 = vmax.f32 %v1067, 0.0
    %v1076 = vmax.f32 %v1069, 0.0
    %v1077 = vmax.f32 %v1071, 0.0
    %v1078 = vmax.f32 %v1073, 0.0
    %v1079 = vld [vmem:[%s4 + $0x48] sm:$0xf]
    %v1080 = vld [vmem:[%s4 + $0x4c] sm:$0xf]
    %v1081 = vpack.c.bf16 %v1077, %v1075
    %v1082 = vpack.c.bf16 %v1078, %v1076
    %v1085 = vunpack.c.l.b16 %v1079
    %v1086 = vunpack.c.l.b16 %v1080
    %v1087 = vpack.c.b16 %v1086, %v1085
    %v1089 = vsel %vm1028, %v1087, 0
    %1091 = vmatprep.subr.bf16.mxu0 %v1082
    %1092 = vmatpush1.bf16.msra.mxu0 %v1081
    %1093 = vmatprep.subr.bf16.mxu0 0
    %1094 = vmatpush1.bf16.msra.mxu0 0
    %1095 = vmatprep.subr.bf16.mxu0 0
    %1096 = vmatpush1.bf16.msra.mxu0 0
    %1097 = vmatprep.subr.bf16.mxu0 0
    %1098 = vmatpush1.bf16.msra.mxu0 0
    %1099 = vmatprep.subr.bf16.mxu0 0
    %1100 = vmatpush1.bf16.msra.mxu0 0
    %1101 = vmatprep.subr.bf16.mxu0 0
    %1102 = vmatpush1.bf16.msra.mxu0 0
    %1103 = vmatprep.subr.bf16.mxu0 0
    %1104 = vmatpush1.bf16.msra.mxu0 0
    %1105 = vmatprep.subr.bf16.mxu0 0
    %1106 = vmatpush1.bf16.msra.mxu0 0
    %1107 = vmatprep.subr.bf16.mxu0 0
    %1108 = vmatpush1.bf16.msra.mxu0 0
    %1109 = vmatprep.subr.bf16.mxu0 0
    %1110 = vmatpush1.bf16.msra.mxu0 0
    %1111 = vmatprep.subr.bf16.mxu0 0
    %1112 = vmatpush1.bf16.msra.mxu0 0
    %1113 = vmatprep.subr.bf16.mxu0 0
    %1114 = vmatpush1.bf16.msra.mxu0 0
    %1115 = vmatprep.subr.bf16.mxu0 0
    %1116 = vmatpush1.bf16.msra.mxu0 0
    %1117 = vmatprep.subr.bf16.mxu0 0
    %1118 = vmatpush1.bf16.msra.mxu0 0
    %1119 = vmatprep.subr.bf16.mxu0 0
    %1120 = vmatpush1.bf16.msra.mxu0 0
    %1121 = vmatprep.subr.bf16.mxu0 0
    %1122 = vmatpush1.bf16.msra.mxu0 0
    %1123 = vmatprep.mubr.bf16.mxu0 0
    %1124 = vmatmul.mubr.bf16.gmra.mrb[0].mxu0 %v1089
    %v1125 = vpop.f32.mrb[0].mxu0
    %v1126 = vadd.f32 0.0, %v1125
    %v1127 = vpop.f32.mrb[0].mxu0
    %v1128 = vadd.f32 0.0, %v1127
    %v1129 = vpop.f32.mrb[0].mxu0
    %v1130 = vpop.f32.mrb[0].mxu0
    %1131 = vdwg.mxu0
    %v1132 = vld [vmem:[%s4 + $0x50] sm:$0xf]
    %v1133 = vld [vmem:[%s4 + $0x54] sm:$0xf]
    %v1134 = vld [vmem:[%s4 + $0x58] sm:$0xf]
    %v1135 = vld [vmem:[%s4 + $0x5c] sm:$0xf]
    %v1136 = vld [vmem:[%s4 + $0x60] sm:$0xf]
    %v1137 = vld [vmem:[%s4 + $0x64] sm:$0xf]
    %v1138 = vld [vmem:[%s4 + $0x68] sm:$0xf]
    %v1139 = vld [vmem:[%s4 + $0x6c] sm:$0xf]
    %v1140 = vld [vmem:[%s4 + $0x70] sm:$0xf]
    %v1141 = vld [vmem:[%s4 + $0x74] sm:$0xf]
    %v1142 = vpack.c.bf16 %v940, %v938
    %v1143 = vpack.c.bf16 %v941, %v939
    %v1144 = vpack.c.bf16 %v944, %v942
    %v1145 = vpack.c.bf16 %v945, %v943
    %v1146 = vpack.c.bf16 %v948, %v946
    %v1147 = vpack.c.bf16 %v949, %v947
    %v1148 = vpack.c.bf16 %v952, %v950
    %v1149 = vpack.c.bf16 %v953, %v951
    %v1150 = vpack.c.bf16 %v956, %v954
    %v1151 = vpack.c.bf16 %v957, %v955
    %v1162 = vunpack.c.l.b16 %v1132
    %v1163 = vunpack.c.l.b16 %v1133
    %v1164 = vunpack.c.l.b16 %v1134
    %v1165 = vunpack.c.l.b16 %v1135
    %v1166 = vunpack.c.l.b16 %v1136
    %v1167 = vunpack.c.l.b16 %v1137
    %v1168 = vunpack.c.l.b16 %v1138
    %v1169 = vunpack.c.l.b16 %v1139
    %v1170 = vunpack.c.l.b16 %v1140
    %v1171 = vunpack.c.l.b16 %v1141
    %v1172 = vpack.c.b16 %v1163, %v1162
    %v1173 = vpack.c.b16 %v1165, %v1164
    %v1174 = vpack.c.b16 %v1167, %v1166
    %v1175 = vpack.c.b16 %v1169, %v1168
    %v1176 = vpack.c.b16 %v1171, %v1170
    %vm1177 = vcmask 654336
    %v1179 = vsel %vm1177, %v1172, 0
    %v1182 = vsel %vm1177, %v1173, 0
    %v1185 = vsel %vm1177, %v1174, 0
    %v1188 = vsel %vm1177, %v1175, 0
    %v1191 = vsel %vm1177, %v1176, 0
    %1193 = vmatprep.subr.bf16.mxu0 %v1143
    %1194 = vmatpush1.bf16.msra.mxu0 %v1142
    %1195 = vmatprep.subr.bf16.mxu0 %v1145
    %1196 = vmatpush1.bf16.msra.mxu0 %v1144
    %1197 = vmatprep.subr.bf16.mxu0 %v1147
    %1198 = vmatpush1.bf16.msra.mxu0 %v1146
    %1199 = vmatprep.subr.bf16.mxu0 %v1149
    %1200 = vmatpush1.bf16.msra.mxu0 %v1148
    %1201 = vmatprep.subr.bf16.mxu0 %v1151
    %1202 = vmatpush1.bf16.msra.mxu0 %v1150
    %1203 = vmatprep.subr.bf16.mxu0 0
    %1204 = vmatpush1.bf16.msra.mxu0 0
    %1205 = vmatprep.subr.bf16.mxu0 0
    %1206 = vmatpush1.bf16.msra.mxu0 0
    %1207 = vmatprep.subr.bf16.mxu0 0
    %1208 = vmatpush1.bf16.msra.mxu0 0
    %1209 = vmatprep.subr.bf16.mxu0 0
    %1210 = vmatpush1.bf16.msra.mxu0 0
    %1211 = vmatprep.subr.bf16.mxu0 0
    %1212 = vmatpush1.bf16.msra.mxu0 0
    %1213 = vmatprep.subr.bf16.mxu0 0
    %1214 = vmatpush1.bf16.msra.mxu0 0
    %1215 = vmatprep.subr.bf16.mxu0 0
    %1216 = vmatpush1.bf16.msra.mxu0 0
    %1217 = vmatprep.subr.bf16.mxu0 0
    %1218 = vmatpush1.bf16.msra.mxu0 0
    %1219 = vmatprep.subr.bf16.mxu0 0
    %1220 = vmatpush1.bf16.msra.mxu0 0
    %1221 = vmatprep.subr.bf16.mxu0 0
    %1222 = vmatpush1.bf16.msra.mxu0 0
    %1223 = vmatprep.subr.bf16.mxu0 0
    %1224 = vmatpush1.bf16.msra.mxu0 0
    %1225 = vmatprep.mubr.bf16.mxu0 0
    %1226 = vmatmul.mubr.bf16.gmra.mrb[0].mxu0 %v1179
    %v1227 = vpop.f32.mrb[0].mxu0
    %v1228 = vadd.f32 0.0, %v1227
    %v1229 = vpop.f32.mrb[0].mxu0
    %v1230 = vadd.f32 0.0, %v1229
    %v1231 = vpop.f32.mrb[0].mxu0
    %v1232 = vadd.f32 0.0, %v1231
    %v1233 = vpop.f32.mrb[0].mxu0
    %v1234 = vadd.f32 0.0, %v1233
    %1235 = vmatprep.mubr.bf16.mxu0 0
    %1236 = vmatmul.mubr.bf16.gmra.mrb[0].mxu0 %v1182
    %v1237 = vpop.f32.mrb[0].mxu0
    %v1238 = vadd.f32 0.0, %v1237
    %v1239 = vpop.f32.mrb[0].mxu0
    %v1240 = vadd.f32 0.0, %v1239
    %v1241 = vpop.f32.mrb[0].mxu0
    %v1242 = vadd.f32 0.0, %v1241
    %v1243 = vpop.f32.mrb[0].mxu0
    %v1244 = vadd.f32 0.0, %v1243
    %1245 = vmatprep.mubr.bf16.mxu0 0
    %1246 = vmatmul.mubr.bf16.gmra.mrb[0].mxu0 %v1185
    %v1247 = vpop.f32.mrb[0].mxu0
    %v1248 = vadd.f32 0.0, %v1247
    %v1249 = vpop.f32.mrb[0].mxu0
    %v1250 = vadd.f32 0.0, %v1249
    %v1251 = vpop.f32.mrb[0].mxu0
    %v1252 = vadd.f32 0.0, %v1251
    %v1253 = vpop.f32.mrb[0].mxu0
    %v1254 = vadd.f32 0.0, %v1253
    %1255 = vmatprep.mubr.bf16.mxu0 0
    %1256 = vmatmul.mubr.bf16.gmra.mrb[0].mxu0 %v1188
    %v1257 = vpop.f32.mrb[0].mxu0
    %v1258 = vadd.f32 0.0, %v1257
    %v1259 = vpop.f32.mrb[0].mxu0
    %v1260 = vadd.f32 0.0, %v1259
    %v1261 = vpop.f32.mrb[0].mxu0
    %v1262 = vadd.f32 0.0, %v1261
    %v1263 = vpop.f32.mrb[0].mxu0
    %v1264 = vadd.f32 0.0, %v1263
    %1265 = vmatprep.mubr.bf16.mxu0 0
    %1266 = vmatmul.mubr.bf16.gmra.mrb[0].mxu0 %v1191
    %v1267 = vpop.f32.mrb[0].mxu0
    %v1268 = vadd.f32 0.0, %v1267
    %v1269 = vpop.f32.mrb[0].mxu0
    %v1270 = vadd.f32 0.0, %v1269
    %v1271 = vpop.f32.mrb[0].mxu0
    %v1272 = vadd.f32 0.0, %v1271
    %v1273 = vpop.f32.mrb[0].mxu0
    %v1274 = vadd.f32 0.0, %v1273
    %1275 = vdwg.mxu0
    %v1276 = vmax.f32 %v1228, 0.0
    %v1277 = vmax.f32 %v1230, 0.0
    %v1278 = vmax.f32 %v1232, 0.0
    %v1279 = vmax.f32 %v1234, 0.0
    %v1280 = vmax.f32 %v1238, 0.0
    %v1281 = vmax.f32 %v1240, 0.0
    %v1282 = vmax.f32 %v1242, 0.0
    %v1283 = vmax.f32 %v1244, 0.0
    %v1284 = vmax.f32 %v1248, 0.0
    %v1285 = vmax.f32 %v1250, 0.0
    %v1286 = vmax.f32 %v1252, 0.0
    %v1287 = vmax.f32 %v1254, 0.0
    %v1288 = vmax.f32 %v1258, 0.0
    %v1289 = vmax.f32 %v1260, 0.0
    %v1290 = vmax.f32 %v1262, 0.0
    %v1291 = vmax.f32 %v1264, 0.0
    %v1292 = vmax.f32 %v1268, 0.0
    %v1293 = vmax.f32 %v1270, 0.0
    %v1294 = vmax.f32 %v1272, 0.0
    %v1295 = vmax.f32 %v1274, 0.0
    %v1296 = vld [vmem:[%s4 + $0x78] sm:$0xf]
    %v1297 = vld [vmem:[%s4 + $0x7c] sm:$0xf]
    %v1298 = vld [vmem:[%s4 + $0x80] sm:$0xf]
    %v1299 = vld [vmem:[%s4 + $0x84] sm:$0xf]
    %v1300 = vld [vmem:[%s4 + $0x88] sm:$0xf]
    %v1301 = vld [vmem:[%s4 + $0x8c] sm:$0xf]
    %v1302 = vld [vmem:[%s4 + $0x90] sm:$0xf]
    %v1303 = vld [vmem:[%s4 + $0x94] sm:$0xf]
    %v1304 = vld [vmem:[%s4 + $0x98] sm:$0xf]
    %v1305 = vld [vmem:[%s4 + $0x9c] sm:$0xf]
    %v1306 = vpack.c.bf16 %v1278, %v1276
    %v1307 = vpack.c.bf16 %v1279, %v1277
    %v1308 = vpack.c.bf16 %v1282, %v1280
    %v1309 = vpack.c.bf16 %v1283, %v1281
    %v1310 = vpack.c.bf16 %v1286, %v1284
    %v1311 = vpack.c.bf16 %v1287, %v1285
    %v1312 = vpack.c.bf16 %v1290, %v1288
    %v1313 = vpack.c.bf16 %v1291, %v1289
    %v1314 = vpack.c.bf16 %v1294, %v1292
    %v1315 = vpack.c.bf16 %v1295, %v1293
    %v1326 = vunpack.c.l.b16 %v1296
    %v1327 = vunpack.c.l.b16 %v1297
    %v1328 = vunpack.c.l.b16 %v1298
    %v1329 = vunpack.c.l.b16 %v1299
    %v1330 = vunpack.c.l.b16 %v1300
    %v1331 = vunpack.c.l.b16 %v1301
    %v1332 = vunpack.c.l.b16 %v1302
    %v1333 = vunpack.c.l.b16 %v1303
    %v1334 = vunpack.c.l.b16 %v1304
    %v1335 = vunpack.c.l.b16 %v1305
    %v1336 = vpack.c.b16 %v1327, %v1326
    %v1337 = vpack.c.b16 %v1329, %v1328
    %v1338 = vpack.c.b16 %v1331, %v1330
    %v1339 = vpack.c.b16 %v1333, %v1332
    %v1340 = vpack.c.b16 %v1335, %v1334
    %v1342 = vsel %vm1177, %v1336, 0
    %v1345 = vsel %vm1177, %v1337, 0
    %v1348 = vsel %vm1177, %v1338, 0
    %v1351 = vsel %vm1177, %v1339, 0
    %v1354 = vsel %vm1177, %v1340, 0
    %1356 = vmatprep.subr.bf16.mxu0 %v1307
    %1357 = vmatpush1.bf16.msra.mxu0 %v1306
    %1358 = vmatprep.subr.bf16.mxu0 %v1309
    %1359 = vmatpush1.bf16.msra.mxu0 %v1308
    %1360 = vmatprep.subr.bf16.mxu0 %v1311
    %1361 = vmatpush1.bf16.msra.mxu0 %v1310
    %1362 = vmatprep.subr.bf16.mxu0 %v1313
    %1363 = vmatpush1.bf16.msra.mxu0 %v1312
    %1364 = vmatprep.subr.bf16.mxu0 %v1315
    %1365 = vmatpush1.bf16.msra.mxu0 %v1314
    %1366 = vmatprep.subr.bf16.mxu0 0
    %1367 = vmatpush1.bf16.msra.mxu0 0
    %1368 = vmatprep.subr.bf16.mxu0 0
    %1369 = vmatpush1.bf16.msra.mxu0 0
    %1370 = vmatprep.subr.bf16.mxu0 0
    %1371 = vmatpush1.bf16.msra.mxu0 0
    %1372 = vmatprep.subr.bf16.mxu0 0
    %1373 = vmatpush1.bf16.msra.mxu0 0
    %1374 = vmatprep.subr.bf16.mxu0 0
    %1375 = vmatpush1.bf16.msra.mxu0 0
    %1376 = vmatprep.subr.bf16.mxu0 0
    %1377 = vmatpush1.bf16.msra.mxu0 0
    %1378 = vmatprep.subr.bf16.mxu0 0
    %1379 = vmatpush1.bf16.msra.mxu0 0
    %1380 = vmatprep.subr.bf16.mxu0 0
    %1381 = vmatpush1.bf16.msra.mxu0 0
    %1382 = vmatprep.subr.bf16.mxu0 0
    %1383 = vmatpush1.bf16.msra.mxu0 0
    %1384 = vmatprep.subr.bf16.mxu0 0
    %1385 = vmatpush1.bf16.msra.mxu0 0
    %1386 = vmatprep.subr.bf16.mxu0 0
    %1387 = vmatpush1.bf16.msra.mxu0 0
    %1388 = vmatprep.mubr.bf16.mxu0 0
    %1389 = vmatmul.mubr.bf16.gmra.mrb[0].mxu0 %v1342
    %v1390 = vpop.f32.mrb[0].mxu0
    %v1391 = vadd.f32 0.0, %v1390
    %v1392 = vpop.f32.mrb[0].mxu0
    %v1393 = vadd.f32 0.0, %v1392
    %v1394 = vpop.f32.mrb[0].mxu0
    %v1395 = vadd.f32 0.0, %v1394
    %v1396 = vpop.f32.mrb[0].mxu0
    %v1397 = vadd.f32 0.0, %v1396
    %1398 = vmatprep.mubr.bf16.mxu0 0
    %1399 = vmatmul.mubr.bf16.gmra.mrb[0].mxu0 %v1345
    %v1400 = vpop.f32.mrb[0].mxu0
    %v1401 = vadd.f32 0.0, %v1400
    %v1402 = vpop.f32.mrb[0].mxu0
    %v1403 = vadd.f32 0.0, %v1402
    %v1404 = vpop.f32.mrb[0].mxu0
    %v1405 = vadd.f32 0.0, %v1404
    %v1406 = vpop.f32.mrb[0].mxu0
    %v1407 = vadd.f32 0.0, %v1406
    %1408 = vmatprep.mubr.bf16.mxu0 0
    %1409 = vmatmul.mubr.bf16.gmra.mrb[0].mxu0 %v1348
    %v1410 = vpop.f32.mrb[0].mxu0
    %v1411 = vadd.f32 0.0, %v1410
    %v1412 = vpop.f32.mrb[0].mxu0
    %v1413 = vadd.f32 0.0, %v1412
    %v1414 = vpop.f32.mrb[0].mxu0
    %v1415 = vadd.f32 0.0, %v1414
    %v1416 = vpop.f32.mrb[0].mxu0
    %v1417 = vadd.f32 0.0, %v1416
    %1418 = vmatprep.mubr.bf16.mxu0 0
    %1419 = vmatmul.mubr.bf16.gmra.mrb[0].mxu0 %v1351
    %v1420 = vpop.f32.mrb[0].mxu0
    %v1421 = vadd.f32 0.0, %v1420
    %v1422 = vpop.f32.mrb[0].mxu0
    %v1423 = vadd.f32 0.0, %v1422
    %v1424 = vpop.f32.mrb[0].mxu0
    %v1425 = vadd.f32 0.0, %v1424
    %v1426 = vpop.f32.mrb[0].mxu0
    %v1427 = vadd.f32 0.0, %v1426
    %1428 = vmatprep.mubr.bf16.mxu0 0
    %1429 = vmatmul.mubr.bf16.gmra.mrb[0].mxu0 %v1354
    %v1430 = vpop.f32.mrb[0].mxu0
    %v1431 = vadd.f32 0.0, %v1430
    %v1432 = vpop.f32.mrb[0].mxu0
    %v1433 = vadd.f32 0.0, %v1432
    %v1434 = vpop.f32.mrb[0].mxu0
    %v1435 = vadd.f32 0.0, %v1434
    %v1436 = vpop.f32.mrb[0].mxu0
    %v1437 = vadd.f32 0.0, %v1436
    %1438 = vdwg.mxu0
    %v1439 = vmax.f32 %v1391, 0.0
    %v1440 = vmax.f32 %v1393, 0.0
    %v1441 = vmax.f32 %v1395, 0.0
    %v1442 = vmax.f32 %v1397, 0.0
    %v1443 = vmax.f32 %v1401, 0.0
    %v1444 = vmax.f32 %v1403, 0.0
    %v1445 = vmax.f32 %v1405, 0.0
    %v1446 = vmax.f32 %v1407, 0.0
    %v1447 = vmax.f32 %v1411, 0.0
    %v1448 = vmax.f32 %v1413, 0.0
    %v1449 = vmax.f32 %v1415, 0.0
    %v1450 = vmax.f32 %v1417, 0.0
    %v1451 = vmax.f32 %v1421, 0.0
    %v1452 = vmax.f32 %v1423, 0.0
    %v1453 = vmax.f32 %v1425, 0.0
    %v1454 = vmax.f32 %v1427, 0.0
    %v1455 = vmax.f32 %v1431, 0.0
    %v1456 = vmax.f32 %v1433, 0.0
    %v1457 = vmax.f32 %v1435, 0.0
    %v1458 = vmax.f32 %v1437, 0.0
    %v1459 = vld [vmem:[%s4 + $0xa0] sm:$0xf]
    %v1460 = vld [vmem:[%s4 + $0xa4] sm:$0xf]
    %v1461 = vld [vmem:[%s4 + $0xa8] sm:$0xf]
    %v1462 = vld [vmem:[%s4 + $0xac] sm:$0xf]
    %v1463 = vld [vmem:[%s4 + $0xb0] sm:$0xf]
    %v1464 = vld [vmem:[%s4 + $0xb4] sm:$0xf]
    %v1465 = vld [vmem:[%s4 + $0xb8] sm:$0xf]
    %v1466 = vld [vmem:[%s4 + $0xbc] sm:$0xf]
    %v1467 = vld [vmem:[%s4 + $0xc0] sm:$0xf]
    %v1468 = vld [vmem:[%s4 + $0xc4] sm:$0xf]
    %v1469 = vld [vmem:[%s4 + $0xc8] sm:$0xf]
    %v1470 = vld [vmem:[%s4 + $0xcc] sm:$0xf]
    %v1471 = vld [vmem:[%s4 + $0xd0] sm:$0xf]
    %v1472 = vld [vmem:[%s4 + $0xd4] sm:$0xf]
    %v1473 = vld [vmem:[%s4 + $0xd8] sm:$0xf]
    %v1474 = vld [vmem:[%s4 + $0xdc] sm:$0xf]
    %v1475 = vpack.c.bf16 %v1441, %v1439
    %v1476 = vpack.c.bf16 %v1442, %v1440
    %v1477 = vpack.c.bf16 %v1445, %v1443
    %v1478 = vpack.c.bf16 %v1446, %v1444
    %v1479 = vpack.c.bf16 %v1449, %v1447
    %v1480 = vpack.c.bf16 %v1450, %v1448
    %v1481 = vpack.c.bf16 %v1453, %v1451
    %v1482 = vpack.c.bf16 %v1454, %v1452
    %v1483 = vpack.c.bf16 %v1457, %v1455
    %v1484 = vpack.c.bf16 %v1458, %v1456
    %v1501 = vunpack.c.l.b16 %v1459
    %v1502 = vunpack.c.l.b16 %v1460
    %v1503 = vunpack.c.l.b16 %v1461
    %v1504 = vunpack.c.l.b16 %v1462
    %v1505 = vunpack.c.l.b16 %v1463
    %v1506 = vunpack.c.l.b16 %v1464
    %v1507 = vunpack.c.l.b16 %v1465
    %v1508 = vunpack.c.l.b16 %v1466
    %v1509 = vunpack.c.l.b16 %v1467
    %v1510 = vunpack.c.l.b16 %v1468
    %v1511 = vunpack.c.l.b16 %v1469
    %v1512 = vunpack.c.l.b16 %v1470
    %v1513 = vunpack.c.l.b16 %v1471
    %v1514 = vunpack.c.l.b16 %v1472
    %v1515 = vunpack.c.l.b16 %v1473
    %v1516 = vunpack.c.l.b16 %v1474
    %v1517 = vpack.c.b16 %v1502, %v1501
    %v1518 = vpack.c.b16 %v1504, %v1503
    %v1519 = vpack.c.b16 %v1506, %v1505
    %v1520 = vpack.c.b16 %v1508, %v1507
    %v1521 = vpack.c.b16 %v1510, %v1509
    %v1522 = vpack.c.b16 %v1512, %v1511
    %v1523 = vpack.c.b16 %v1514, %v1513
    %v1524 = vpack.c.b16 %v1516, %v1515
    %v1526 = vsel %vm1177, %v1517, 0
    %v1529 = vsel %vm1177, %v1518, 0
    %v1532 = vsel %vm1177, %v1519, 0
    %v1535 = vsel %vm1177, %v1520, 0
    %v1538 = vsel %vm1177, %v1521, 0
    %v1541 = vsel %vm1177, %v1522, 0
    %v1544 = vsel %vm1177, %v1523, 0
    %v1547 = vsel %vm1177, %v1524, 0
    %1549 = vmatprep.subr.bf16.mxu0 %v1476
    %1550 = vmatpush1.bf16.msra.mxu0 %v1475
    %1551 = vmatprep.subr.bf16.mxu0 %v1478
    %1552 = vmatpush1.bf16.msra.mxu0 %v1477
    %1553 = vmatprep.subr.bf16.mxu0 %v1480
    %1554 = vmatpush1.bf16.msra.mxu0 %v1479
    %1555 = vmatprep.subr.bf16.mxu0 %v1482
    %1556 = vmatpush1.bf16.msra.mxu0 %v1481
    %1557 = vmatprep.subr.bf16.mxu0 %v1484
    %1558 = vmatpush1.bf16.msra.mxu0 %v1483
    %1559 = vmatprep.subr.bf16.mxu0 0
    %1560 = vmatpush1.bf16.msra.mxu0 0
    %1561 = vmatprep.subr.bf16.mxu0 0
    %1562 = vmatpush1.bf16.msra.mxu0 0
    %1563 = vmatprep.subr.bf16.mxu0 0
    %1564 = vmatpush1.bf16.msra.mxu0 0
    %1565 = vmatprep.subr.bf16.mxu0 0
    %1566 = vmatpush1.bf16.msra.mxu0 0
    %1567 = vmatprep.subr.bf16.mxu0 0
    %1568 = vmatpush1.bf16.msra.mxu0 0
    %1569 = vmatprep.subr.bf16.mxu0 0
    %1570 = vmatpush1.bf16.msra.mxu0 0
    %1571 = vmatprep.subr.bf16.mxu0 0
    %1572 = vmatpush1.bf16.msra.mxu0 0
    %1573 = vmatprep.subr.bf16.mxu0 0
    %1574 = vmatpush1.bf16.msra.mxu0 0
    %1575 = vmatprep.subr.bf16.mxu0 0
    %1576 = vmatpush1.bf16.msra.mxu0 0
    %1577 = vmatprep.subr.bf16.mxu0 0
    %1578 = vmatpush1.bf16.msra.mxu0 0
    %1579 = vmatprep.subr.bf16.mxu0 0
    %1580 = vmatpush1.bf16.msra.mxu0 0
    %1581 = vmatprep.mubr.bf16.mxu0 0
    %1582 = vmatmul.mubr.bf16.gmra.mrb[0].mxu0 %v1526
    %v1583 = vpop.f32.mrb[0].mxu0
    %v1584 = vadd.f32 0.0, %v1583
    %v1585 = vpop.f32.mrb[0].mxu0
    %v1586 = vadd.f32 0.0, %v1585
    %v1587 = vpop.f32.mrb[0].mxu0
    %v1588 = vadd.f32 0.0, %v1587
    %v1589 = vpop.f32.mrb[0].mxu0
    %v1590 = vadd.f32 0.0, %v1589
    %1591 = vmatprep.mubr.bf16.mxu0 0
    %1592 = vmatmul.mubr.bf16.gmra.mrb[0].mxu0 %v1529
    %v1593 = vpop.f32.mrb[0].mxu0
    %v1594 = vadd.f32 0.0, %v1593
    %v1595 = vpop.f32.mrb[0].mxu0
    %v1596 = vadd.f32 0.0, %v1595
    %v1597 = vpop.f32.mrb[0].mxu0
    %v1598 = vadd.f32 0.0, %v1597
    %v1599 = vpop.f32.mrb[0].mxu0
    %v1600 = vadd.f32 0.0, %v1599
    %1601 = vmatprep.mubr.bf16.mxu0 0
    %1602 = vmatmul.mubr.bf16.gmra.mrb[0].mxu0 %v1532
    %v1603 = vpop.f32.mrb[0].mxu0
    %v1604 = vadd.f32 0.0, %v1603
    %v1605 = vpop.f32.mrb[0].mxu0
    %v1606 = vadd.f32 0.0, %v1605
    %v1607 = vpop.f32.mrb[0].mxu0
    %v1608 = vadd.f32 0.0, %v1607
    %v1609 = vpop.f32.mrb[0].mxu0
    %v1610 = vadd.f32 0.0, %v1609
    %1611 = vmatprep.mubr.bf16.mxu0 0
    %1612 = vmatmul.mubr.bf16.gmra.mrb[0].mxu0 %v1535
    %v1613 = vpop.f32.mrb[0].mxu0
    %v1614 = vadd.f32 0.0, %v1613
    %v1615 = vpop.f32.mrb[0].mxu0
    %v1616 = vadd.f32 0.0, %v1615
    %v1617 = vpop.f32.mrb[0].mxu0
    %v1618 = vadd.f32 0.0, %v1617
    %v1619 = vpop.f32.mrb[0].mxu0
    %v1620 = vadd.f32 0.0, %v1619
    %1621 = vmatprep.mubr.bf16.mxu0 0
    %1622 = vmatmul.mubr.bf16.gmra.mrb[0].mxu0 %v1538
    %v1623 = vpop.f32.mrb[0].mxu0
    %v1624 = vadd.f32 0.0, %v1623
    %v1625 = vpop.f32.mrb[0].mxu0
    %v1626 = vadd.f32 0.0, %v1625
    %v1627 = vpop.f32.mrb[0].mxu0
    %v1628 = vadd.f32 0.0, %v1627
    %v1629 = vpop.f32.mrb[0].mxu0
    %v1630 = vadd.f32 0.0, %v1629
    %1631 = vmatprep.mubr.bf16.mxu0 0
    %1632 = vmatmul.mubr.bf16.gmra.mrb[0].mxu0 %v1541
    %v1633 = vpop.f32.mrb[0].mxu0
    %v1634 = vadd.f32 0.0, %v1633
    %v1635 = vpop.f32.mrb[0].mxu0
    %v1636 = vadd.f32 0.0, %v1635
    %v1637 = vpop.f32.mrb[0].mxu0
    %v1638 = vadd.f32 0.0, %v1637
    %v1639 = vpop.f32.mrb[0].mxu0
    %v1640 = vadd.f32 0.0, %v1639
    %1641 = vmatprep.mubr.bf16.mxu0 0
    %1642 = vmatmul.mubr.bf16.gmra.mrb[0].mxu0 %v1544
    %v1643 = vpop.f32.mrb[0].mxu0
    %v1644 = vadd.f32 0.0, %v1643
    %v1645 = vpop.f32.mrb[0].mxu0
    %v1646 = vadd.f32 0.0, %v1645
    %v1647 = vpop.f32.mrb[0].mxu0
    %v1648 = vadd.f32 0.0, %v1647
    %v1649 = vpop.f32.mrb[0].mxu0
    %v1650 = vadd.f32 0.0, %v1649
    %1651 = vmatprep.mubr.bf16.mxu0 0
    %1652 = vmatmul.mubr.bf16.gmra.mrb[0].mxu0 %v1547
    %v1653 = vpop.f32.mrb[0].mxu0
    %v1654 = vadd.f32 0.0, %v1653
    %v1655 = vpop.f32.mrb[0].mxu0
    %v1656 = vadd.f32 0.0, %v1655
    %v1657 = vpop.f32.mrb[0].mxu0
    %v1658 = vadd.f32 0.0, %v1657
    %v1659 = vpop.f32.mrb[0].mxu0
    %v1660 = vadd.f32 0.0, %v1659
    %1661 = vdwg.mxu0
    %v1662 = vmax.f32 %v1584, 0.0
    %v1663 = vmax.f32 %v1586, 0.0
    %v1664 = vmax.f32 %v1588, 0.0
    %v1665 = vmax.f32 %v1590, 0.0
    %v1666 = vmax.f32 %v1594, 0.0
    %v1667 = vmax.f32 %v1596, 0.0
    %v1668 = vmax.f32 %v1598, 0.0
    %v1669 = vmax.f32 %v1600, 0.0
    %v1670 = vmax.f32 %v1604, 0.0
    %v1671 = vmax.f32 %v1606, 0.0
    %v1672 = vmax.f32 %v1608, 0.0
    %v1673 = vmax.f32 %v1610, 0.0
    %v1674 = vmax.f32 %v1614, 0.0
    %v1675 = vmax.f32 %v1616, 0.0
    %v1676 = vmax.f32 %v1618, 0.0
    %v1677 = vmax.f32 %v1620, 0.0
    %v1678 = vmax.f32 %v1624, 0.0
    %v1679 = vmax.f32 %v1626, 0.0
    %v1680 = vmax.f32 %v1628, 0.0
    %v1681 = vmax.f32 %v1630, 0.0
    %v1682 = vmax.f32 %v1634, 0.0
    %v1683 = vmax.f32 %v1636, 0.0
    %v1684 = vmax.f32 %v1638, 0.0
    %v1685 = vmax.f32 %v1640, 0.0
    %v1686 = vmax.f32 %v1644, 0.0
    %v1687 = vmax.f32 %v1646, 0.0
    %v1688 = vmax.f32 %v1648, 0.0
    %v1689 = vmax.f32 %v1650, 0.0
    %v1690 = vmax.f32 %v1654, 0.0
    %v1691 = vmax.f32 %v1656, 0.0
    %v1692 = vmax.f32 %v1658, 0.0
    %v1693 = vmax.f32 %v1660, 0.0
    %v1694 = vld [vmem:[%s5] sm:$0xf]
    %v1695 = vld [vmem:[%s5 + $0x4] sm:$0xf]
    %v1696 = vld [vmem:[%s5 + $0x8] sm:$0xf]
    %v1697 = vld [vmem:[%s5 + $0xc] sm:$0xf]
    %v1698 = vld [vmem:[%s5 + $0x10] sm:$0xf]
    %v1699 = vld [vmem:[%s5 + $0x14] sm:$0xf]
    %v1700 = vld [vmem:[%s5 + $0x18] sm:$0xf]
    %v1701 = vld [vmem:[%s5 + $0x1c] sm:$0xf]
    %v1702 = vld [vmem:[%s5 + $0x20] sm:$0xf]
    %v1703 = vld [vmem:[%s5 + $0x24] sm:$0xf]
    %v1704 = vld [vmem:[%s5 + $0x28] sm:$0xf]
    %v1705 = vld [vmem:[%s5 + $0x2c] sm:$0xf]
    %v1706 = vld [vmem:[%s5 + $0x30] sm:$0xf]
    %v1707 = vld [vmem:[%s5 + $0x34] sm:$0xf]
    %v1708 = vld [vmem:[%s5 + $0x38] sm:$0xf]
    %v1709 = vld [vmem:[%s5 + $0x3c] sm:$0xf]
    %v1710 = vld [vmem:[%s5 + $0x40] sm:$0xf]
    %v1711 = vld [vmem:[%s5 + $0x44] sm:$0xf]
    %v1712 = vld [vmem:[%s5 + $0x48] sm:$0xf]
    %v1713 = vld [vmem:[%s5 + $0x4c] sm:$0xf]
    %v1714 = vld [vmem:[%s5 + $0x50] sm:$0xf]
    %v1715 = vld [vmem:[%s5 + $0x54] sm:$0xf]
    %v1716 = vld [vmem:[%s5 + $0x58] sm:$0xf]
    %v1717 = vld [vmem:[%s5 + $0x5c] sm:$0xf]
    %v1718 = vld [vmem:[%s5 + $0x60] sm:$0xf]
    %v1719 = vld [vmem:[%s5 + $0x64] sm:$0xf]
    %v1720 = vld [vmem:[%s5 + $0x68] sm:$0xf]
    %v1721 = vld [vmem:[%s5 + $0x6c] sm:$0xf]
    %v1722 = vld [vmem:[%s5 + $0x70] sm:$0xf]
    %v1723 = vld [vmem:[%s5 + $0x74] sm:$0xf]
    %v1724 = vld [vmem:[%s5 + $0x78] sm:$0xf]
    %v1725 = vld [vmem:[%s5 + $0x7c] sm:$0xf]
    %v1726 = vld [vmem:[%s5 + $0x80] sm:$0xf]
    %v1727 = vld [vmem:[%s5 + $0x84] sm:$0xf]
    %v1728 = vld [vmem:[%s5 + $0x88] sm:$0xf]
    %v1729 = vld [vmem:[%s5 + $0x8c] sm:$0xf]
    %v1730 = vld [vmem:[%s5 + $0x90] sm:$0xf]
    %v1731 = vld [vmem:[%s5 + $0x94] sm:$0xf]
    %v1732 = vld [vmem:[%s5 + $0x98] sm:$0xf]
    %v1733 = vld [vmem:[%s5 + $0x9c] sm:$0xf]
    %v1734 = vld [vmem:[%s5 + $0xa0] sm:$0xf]
    %v1735 = vld [vmem:[%s5 + $0xa4] sm:$0xf]
    %v1736 = vld [vmem:[%s5 + $0xa8] sm:$0xf]
    %v1737 = vld [vmem:[%s5 + $0xac] sm:$0xf]
    %v1738 = vld [vmem:[%s5 + $0xb0] sm:$0xf]
    %v1739 = vld [vmem:[%s5 + $0xb4] sm:$0xf]
    %v1740 = vld [vmem:[%s5 + $0xb8] sm:$0xf]
    %v1741 = vld [vmem:[%s5 + $0xbc] sm:$0xf]
    %v1742 = vld [vmem:[%s5 + $0xc0] sm:$0xf]
    %v1743 = vld [vmem:[%s5 + $0xc4] sm:$0xf]
    %v1744 = vld [vmem:[%s5 + $0xc8] sm:$0xf]
    %v1745 = vld [vmem:[%s5 + $0xcc] sm:$0xf]
    %v1746 = vld [vmem:[%s5 + $0xd0] sm:$0xf]
    %v1747 = vld [vmem:[%s5 + $0xd4] sm:$0xf]
    %v1748 = vld [vmem:[%s5 + $0xd8] sm:$0xf]
    %v1749 = vld [vmem:[%s5 + $0xdc] sm:$0xf]
    %v1750 = vld [vmem:[%s5 + $0xe0] sm:$0xf]
    %v1751 = vld [vmem:[%s5 + $0xe4] sm:$0xf]
    %v1752 = vld [vmem:[%s5 + $0xe8] sm:$0xf]
    %v1753 = vld [vmem:[%s5 + $0xec] sm:$0xf]
    %v1754 = vld [vmem:[%s5 + $0xf0] sm:$0xf]
    %v1755 = vld [vmem:[%s5 + $0xf4] sm:$0xf]
    %v1756 = vld [vmem:[%s5 + $0xf8] sm:$0xf]
    %v1757 = vld [vmem:[%s5 + $0xfc] sm:$0xf]
    %v1758 = vpack.c.bf16 %v1664, %v1662
    %v1759 = vpack.c.bf16 %v1665, %v1663
    %v1760 = vpack.c.bf16 %v1668, %v1666
    %v1761 = vpack.c.bf16 %v1669, %v1667
    %v1762 = vpack.c.bf16 %v1672, %v1670
    %v1763 = vpack.c.bf16 %v1673, %v1671
    %v1764 = vpack.c.bf16 %v1676, %v1674
    %v1765 = vpack.c.bf16 %v1677, %v1675
    %v1766 = vpack.c.bf16 %v1680, %v1678
    %v1767 = vpack.c.bf16 %v1681, %v1679
    %v1768 = vpack.c.bf16 %v1684, %v1682
    %v1769 = vpack.c.bf16 %v1685, %v1683
    %v1770 = vpack.c.bf16 %v1688, %v1686
    %v1771 = vpack.c.bf16 %v1689, %v1687
    %v1772 = vpack.c.bf16 %v1692, %v1690
    %v1773 = vpack.c.bf16 %v1693, %v1691
    %v1774 = vld [vmem:[%s7] sm:$0xff]
    %v1775 = vld [vmem:[%s7 + $0x8] sm:$0xff]
    %v1776 = vld [vmem:[%s7 + $0x10] sm:$0xff]
    %v1777 = vld [vmem:[%s7 + $0x18] sm:$0xff]
    %v1778 = vld [vmem:[%s7 + $0x20] sm:$0xff]
    %v1779 = vld [vmem:[%s7 + $0x28] sm:$0xff]
    %v1780 = vld [vmem:[%s7 + $0x30] sm:$0xff]
    %v1781 = vld [vmem:[%s7 + $0x38] sm:$0xff]
    %v1782 = vld [vmem:[%s7 + $0x40] sm:$0xff]
    %v1783 = vld [vmem:[%s7 + $0x48] sm:$0xff]
    %v1784 = vld [vmem:[%s7 + $0x50] sm:$0xff]
    %v1785 = vld [vmem:[%s7 + $0x58] sm:$0xff]
    %v1786 = vld [vmem:[%s7 + $0x60] sm:$0xff]
    %v1787 = vld [vmem:[%s7 + $0x68] sm:$0xff]
    %v1788 = vld [vmem:[%s7 + $0x70] sm:$0xff]
    %v1789 = vld [vmem:[%s7 + $0x78] sm:$0xff]
    %v1790 = vld [vmem:[%s7 + $0x80] sm:$0xff]
    %v1791 = vld [vmem:[%s7 + $0x88] sm:$0xff]
    %v1792 = vld [vmem:[%s7 + $0x90] sm:$0xff]
    %v1793 = vld [vmem:[%s7 + $0x98] sm:$0xff]
    %v1794 = vld [vmem:[%s7 + $0xa0] sm:$0xff]
    %v1795 = vld [vmem:[%s7 + $0xa8] sm:$0xff]
    %v1796 = vld [vmem:[%s7 + $0xb0] sm:$0xff]
    %v1797 = vld [vmem:[%s7 + $0xb8] sm:$0xff]
    %v1798 = vld [vmem:[%s7 + $0xc0] sm:$0xff]
    %v1799 = vld [vmem:[%s7 + $0xc8] sm:$0xff]
    %v1800 = vld [vmem:[%s7 + $0xd0] sm:$0xff]
    %v1801 = vld [vmem:[%s7 + $0xd8] sm:$0xff]
    %v1802 = vld [vmem:[%s7 + $0xe0] sm:$0xff]
    %v1803 = vld [vmem:[%s7 + $0xe8] sm:$0xff]
    %v1804 = vld [vmem:[%s7 + $0xf0] sm:$0xff]
    %v1805 = vld [vmem:[%s7 + $0xf8] sm:$0xff]
    %v1806 = vld [vmem:[%s7 + $0x100] sm:$0xff]
    %v1807 = vld [vmem:[%s7 + $0x108] sm:$0xff]
    %v1808 = vld [vmem:[%s7 + $0x110] sm:$0xff]
    %v1809 = vld [vmem:[%s7 + $0x118] sm:$0xff]
    %v1810 = vld [vmem:[%s7 + $0x120] sm:$0xff]
    %v1811 = vld [vmem:[%s7 + $0x128] sm:$0xff]
    %v1812 = vld [vmem:[%s7 + $0x130] sm:$0xff]
    %v1813 = vld [vmem:[%s7 + $0x138] sm:$0xff]
    %v1814 = vld [vmem:[%s7 + $0x140] sm:$0xff]
    %v1815 = vld [vmem:[%s7 + $0x148] sm:$0xff]
    %v1816 = vld [vmem:[%s7 + $0x150] sm:$0xff]
    %v1817 = vld [vmem:[%s7 + $0x158] sm:$0xff]
    %v1818 = vld [vmem:[%s7 + $0x160] sm:$0xff]
    %v1819 = vld [vmem:[%s7 + $0x168] sm:$0xff]
    %v1820 = vld [vmem:[%s7 + $0x170] sm:$0xff]
    %v1821 = vld [vmem:[%s7 + $0x178] sm:$0xff]
    %v1822 = vld [vmem:[%s7 + $0x180] sm:$0xff]
    %v1823 = vld [vmem:[%s7 + $0x188] sm:$0xff]
    %v1824 = vld [vmem:[%s7 + $0x190] sm:$0xff]
    %v1825 = vld [vmem:[%s7 + $0x198] sm:$0xff]
    %v1826 = vld [vmem:[%s7 + $0x1a0] sm:$0xff]
    %v1827 = vld [vmem:[%s7 + $0x1a8] sm:$0xff]
    %v1828 = vld [vmem:[%s7 + $0x1b0] sm:$0xff]
    %v1829 = vld [vmem:[%s7 + $0x1b8] sm:$0xff]
    %v1830 = vld [vmem:[%s7 + $0x1c0] sm:$0xff]
    %v1831 = vld [vmem:[%s7 + $0x1c8] sm:$0xff]
    %v1832 = vld [vmem:[%s7 + $0x1d0] sm:$0xff]
    %v1833 = vld [vmem:[%s7 + $0x1d8] sm:$0xff]
    %v1834 = vld [vmem:[%s7 + $0x1e0] sm:$0xff]
    %v1835 = vld [vmem:[%s7 + $0x1e8] sm:$0xff]
    %v1836 = vld [vmem:[%s7 + $0x1f0] sm:$0xff]
    %v1837 = vld [vmem:[%s7 + $0x1f8] sm:$0xff]
    %1839 = vset.pattern.permute.xlu0 0
    %1840 = vperm.xlu0 %1839, %v1774
    %v1841 = vpop.permute.xlu0 %1840
    %1844 = vset.pattern.permute.xlu0 0
    %1845 = vperm.xlu0 %1844, %v1775
    %v1846 = vpop.permute.xlu0 %1845
    %1849 = vset.pattern.permute.xlu0 0
    %1850 = vperm.xlu0 %1849, %v1776
    %v1851 = vpop.permute.xlu0 %1850
    %1854 = vset.pattern.permute.xlu0 0
    %1855 = vperm.xlu0 %1854, %v1777
    %v1856 = vpop.permute.xlu0 %1855
    %1859 = vset.pattern.permute.xlu0 0
    %1860 = vperm.xlu0 %1859, %v1778
    %v1861 = vpop.permute.xlu0 %1860
    %1864 = vset.pattern.permute.xlu0 0
    %1865 = vperm.xlu0 %1864, %v1779
    %v1866 = vpop.permute.xlu0 %1865
    %1869 = vset.pattern.permute.xlu0 0
    %1870 = vperm.xlu0 %1869, %v1780
    %v1871 = vpop.permute.xlu0 %1870
    %1874 = vset.pattern.permute.xlu0 0
    %1875 = vperm.xlu0 %1874, %v1781
    %v1876 = vpop.permute.xlu0 %1875
    %1879 = vset.pattern.permute.xlu0 0
    %1880 = vperm.xlu0 %1879, %v1782
    %v1881 = vpop.permute.xlu0 %1880
    %1884 = vset.pattern.permute.xlu0 0
    %1885 = vperm.xlu0 %1884, %v1783
    %v1886 = vpop.permute.xlu0 %1885
    %1889 = vset.pattern.permute.xlu0 0
    %1890 = vperm.xlu0 %1889, %v1784
    %v1891 = vpop.permute.xlu0 %1890
    %1894 = vset.pattern.permute.xlu0 0
    %1895 = vperm.xlu0 %1894, %v1785
    %v1896 = vpop.permute.xlu0 %1895
    %1899 = vset.pattern.permute.xlu0 0
    %1900 = vperm.xlu0 %1899, %v1786
    %v1901 = vpop.permute.xlu0 %1900
    %1904 = vset.pattern.permute.xlu0 0
    %1905 = vperm.xlu0 %1904, %v1787
    %v1906 = vpop.permute.xlu0 %1905
    %1909 = vset.pattern.permute.xlu0 0
    %1910 = vperm.xlu0 %1909, %v1788
    %v1911 = vpop.permute.xlu0 %1910
    %1914 = vset.pattern.permute.xlu0 0
    %1915 = vperm.xlu0 %1914, %v1789
    %v1916 = vpop.permute.xlu0 %1915
    %1919 = vset.pattern.permute.xlu0 0
    %1920 = vperm.xlu0 %1919, %v1790
    %v1921 = vpop.permute.xlu0 %1920
    %1924 = vset.pattern.permute.xlu0 0
    %1925 = vperm.xlu0 %1924, %v1791
    %v1926 = vpop.permute.xlu0 %1925
    %1929 = vset.pattern.permute.xlu0 0
    %1930 = vperm.xlu0 %1929, %v1792
    %v1931 = vpop.permute.xlu0 %1930
    %1934 = vset.pattern.permute.xlu0 0
    %1935 = vperm.xlu0 %1934, %v1793
    %v1936 = vpop.permute.xlu0 %1935
    %1939 = vset.pattern.permute.xlu0 0
    %1940 = vperm.xlu0 %1939, %v1794
    %v1941 = vpop.permute.xlu0 %1940
    %1944 = vset.pattern.permute.xlu0 0
    %1945 = vperm.xlu0 %1944, %v1795
    %v1946 = vpop.permute.xlu0 %1945
    %1949 = vset.pattern.permute.xlu0 0
    %1950 = vperm.xlu0 %1949, %v1796
    %v1951 = vpop.permute.xlu0 %1950
    %1954 = vset.pattern.permute.xlu0 0
    %1955 = vperm.xlu0 %1954, %v1797
    %v1956 = vpop.permute.xlu0 %1955
    %1959 = vset.pattern.permute.xlu0 0
    %1960 = vperm.xlu0 %1959, %v1798
    %v1961 = vpop.permute.xlu0 %1960
    %1964 = vset.pattern.permute.xlu0 0
    %1965 = vperm.xlu0 %1964, %v1799
    %v1966 = vpop.permute.xlu0 %1965
    %1969 = vset.pattern.permute.xlu0 0
    %1970 = vperm.xlu0 %1969, %v1800
    %v1971 = vpop.permute.xlu0 %1970
    %1974 = vset.pattern.permute.xlu0 0
    %1975 = vperm.xlu0 %1974, %v1801
    %v1976 = vpop.permute.xlu0 %1975
    %1979 = vset.pattern.permute.xlu0 0
    %1980 = vperm.xlu0 %1979, %v1802
    %v1981 = vpop.permute.xlu0 %1980
    %1984 = vset.pattern.permute.xlu0 0
    %1985 = vperm.xlu0 %1984, %v1803
    %v1986 = vpop.permute.xlu0 %1985
    %1989 = vset.pattern.permute.xlu0 0
    %1990 = vperm.xlu0 %1989, %v1804
    %v1991 = vpop.permute.xlu0 %1990
    %1994 = vset.pattern.permute.xlu0 0
    %1995 = vperm.xlu0 %1994, %v1805
    %v1996 = vpop.permute.xlu0 %1995
    %1999 = vset.pattern.permute.xlu0 0
    %2000 = vperm.xlu0 %1999, %v1806
    %v2001 = vpop.permute.xlu0 %2000
    %2004 = vset.pattern.permute.xlu0 0
    %2005 = vperm.xlu0 %2004, %v1807
    %v2006 = vpop.permute.xlu0 %2005
    %2009 = vset.pattern.permute.xlu0 0
    %2010 = vperm.xlu0 %2009, %v1808
    %v2011 = vpop.permute.xlu0 %2010
    %2014 = vset.pattern.permute.xlu0 0
    %2015 = vperm.xlu0 %2014, %v1809
    %v2016 = vpop.permute.xlu0 %2015
    %2019 = vset.pattern.permute.xlu0 0
    %2020 = vperm.xlu0 %2019, %v1810
    %v2021 = vpop.permute.xlu0 %2020
    %2024 = vset.pattern.permute.xlu0 0
    %2025 = vperm.xlu0 %2024, %v1811
    %v2026 = vpop.permute.xlu0 %2025
    %2029 = vset.pattern.permute.xlu0 0
    %2030 = vperm.xlu0 %2029, %v1812
    %v2031 = vpop.permute.xlu0 %2030
    %2034 = vset.pattern.permute.xlu0 0
    %2035 = vperm.xlu0 %2034, %v1813
    %v2036 = vpop.permute.xlu0 %2035
    %2039 = vset.pattern.permute.xlu0 0
    %2040 = vperm.xlu0 %2039, %v1814
    %v2041 = vpop.permute.xlu0 %2040
    %2044 = vset.pattern.permute.xlu0 0
    %2045 = vperm.xlu0 %2044, %v1815
    %v2046 = vpop.permute.xlu0 %2045
    %2049 = vset.pattern.permute.xlu0 0
    %2050 = vperm.xlu0 %2049, %v1816
    %v2051 = vpop.permute.xlu0 %2050
    %2054 = vset.pattern.permute.xlu0 0
    %2055 = vperm.xlu0 %2054, %v1817
    %v2056 = vpop.permute.xlu0 %2055
    %2059 = vset.pattern.permute.xlu0 0
    %2060 = vperm.xlu0 %2059, %v1818
    %v2061 = vpop.permute.xlu0 %2060
    %2064 = vset.pattern.permute.xlu0 0
    %2065 = vperm.xlu0 %2064, %v1819
    %v2066 = vpop.permute.xlu0 %2065
    %2069 = vset.pattern.permute.xlu0 0
    %2070 = vperm.xlu0 %2069, %v1820
    %v2071 = vpop.permute.xlu0 %2070
    %2074 = vset.pattern.permute.xlu0 0
    %2075 = vperm.xlu0 %2074, %v1821
    %v2076 = vpop.permute.xlu0 %2075
    %2079 = vset.pattern.permute.xlu0 0
    %2080 = vperm.xlu0 %2079, %v1822
    %v2081 = vpop.permute.xlu0 %2080
    %2084 = vset.pattern.permute.xlu0 0
    %2085 = vperm.xlu0 %2084, %v1823
    %v2086 = vpop.permute.xlu0 %2085
    %2089 = vset.pattern.permute.xlu0 0
    %2090 = vperm.xlu0 %2089, %v1824
    %v2091 = vpop.permute.xlu0 %2090
    %2094 = vset.pattern.permute.xlu0 0
    %2095 = vperm.xlu0 %2094, %v1825
    %v2096 = vpop.permute.xlu0 %2095
    %2099 = vset.pattern.permute.xlu0 0
    %2100 = vperm.xlu0 %2099, %v1826
    %v2101 = vpop.permute.xlu0 %2100
    %2104 = vset.pattern.permute.xlu0 0
    %2105 = vperm.xlu0 %2104, %v1827
    %v2106 = vpop.permute.xlu0 %2105
    %2109 = vset.pattern.permute.xlu0 0
    %2110 = vperm.xlu0 %2109, %v1828
    %v2111 = vpop.permute.xlu0 %2110
    %2114 = vset.pattern.permute.xlu0 0
    %2115 = vperm.xlu0 %2114, %v1829
    %v2116 = vpop.permute.xlu0 %2115
    %2119 = vset.pattern.permute.xlu0 0
    %2120 = vperm.xlu0 %2119, %v1830
    %v2121 = vpop.permute.xlu0 %2120
    %2124 = vset.pattern.permute.xlu0 0
    %2125 = vperm.xlu0 %2124, %v1831
    %v2126 = vpop.permute.xlu0 %2125
    %2129 = vset.pattern.permute.xlu0 0
    %2130 = vperm.xlu0 %2129, %v1832
    %v2131 = vpop.permute.xlu0 %2130
    %2134 = vset.pattern.permute.xlu0 0
    %2135 = vperm.xlu0 %2134, %v1833
    %v2136 = vpop.permute.xlu0 %2135
    %2139 = vset.pattern.permute.xlu0 0
    %2140 = vperm.xlu0 %2139, %v1834
    %v2141 = vpop.permute.xlu0 %2140
    %2144 = vset.pattern.permute.xlu0 0
    %2145 = vperm.xlu0 %2144, %v1835
    %v2146 = vpop.permute.xlu0 %2145
    %2149 = vset.pattern.permute.xlu0 0
    %2150 = vperm.xlu0 %2149, %v1836
    %v2151 = vpop.permute.xlu0 %2150
    %2154 = vset.pattern.permute.xlu0 0
    %2155 = vperm.xlu0 %2154, %v1837
    %v2156 = vpop.permute.xlu0 %2155
    %v2222 = vunpack.c.l.b16 %v1694
    %v2223 = vunpack.c.l.b16 %v1695
    %v2224 = vunpack.c.l.b16 %v1696
    %v2225 = vunpack.c.l.b16 %v1697
    %v2226 = vunpack.c.l.b16 %v1698
    %v2227 = vunpack.c.l.b16 %v1699
    %v2228 = vunpack.c.l.b16 %v1700
    %v2229 = vunpack.c.l.b16 %v1701
    %v2230 = vunpack.c.l.b16 %v1702
    %v2231 = vunpack.c.l.b16 %v1703
    %v2232 = vunpack.c.l.b16 %v1704
    %v2233 = vunpack.c.l.b16 %v1705
    %v2234 = vunpack.c.l.b16 %v1706
    %v2235 = vunpack.c.l.b16 %v1707
    %v2236 = vunpack.c.l.b16 %v1708
    %v2237 = vunpack.c.l.b16 %v1709
    %v2238 = vunpack.c.l.b16 %v1710
    %v2239 = vunpack.c.l.b16 %v1711
    %v2240 = vunpack.c.l.b16 %v1712
    %v2241 = vunpack.c.l.b16 %v1713
    %v2242 = vunpack.c.l.b16 %v1714
    %v2243 = vunpack.c.l.b16 %v1715
    %v2244 = vunpack.c.l.b16 %v1716
    %v2245 = vunpack.c.l.b16 %v1717
    %v2246 = vunpack.c.l.b16 %v1718
    %v2247 = vunpack.c.l.b16 %v1719
    %v2248 = vunpack.c.l.b16 %v1720
    %v2249 = vunpack.c.l.b16 %v1721
    %v2250 = vunpack.c.l.b16 %v1722
    %v2251 = vunpack.c.l.b16 %v1723
    %v2252 = vunpack.c.l.b16 %v1724
    %v2253 = vunpack.c.l.b16 %v1725
    %v2254 = vunpack.c.l.b16 %v1726
    %v2255 = vunpack.c.l.b16 %v1727
    %v2256 = vunpack.c.l.b16 %v1728
    %v2257 = vunpack.c.l.b16 %v1729
    %v2258 = vunpack.c.l.b16 %v1730
    %v2259 = vunpack.c.l.b16 %v1731
    %v2260 = vunpack.c.l.b16 %v1732
    %v2261 = vunpack.c.l.b16 %v1733
    %v2262 = vunpack.c.l.b16 %v1734
    %v2263 = vunpack.c.l.b16 %v1735
    %v2264 = vunpack.c.l.b16 %v1736
    %v2265 = vunpack.c.l.b16 %v1737
    %v2266 = vunpack.c.l.b16 %v1738
    %v2267 = vunpack.c.l.b16 %v1739
    %v2268 = vunpack.c.l.b16 %v1740
    %v2269 = vunpack.c.l.b16 %v1741
    %v2270 = vunpack.c.l.b16 %v1742
    %v2271 = vunpack.c.l.b16 %v1743
    %v2272 = vunpack.c.l.b16 %v1744
    %v2273 = vunpack.c.l.b16 %v1745
    %v2274 = vunpack.c.l.b16 %v1746
    %v2275 = vunpack.c.l.b16 %v1747
    %v2276 = vunpack.c.l.b16 %v1748
    %v2277 = vunpack.c.l.b16 %v1749
    %v2278 = vunpack.c.l.b16 %v1750
    %v2279 = vunpack.c.l.b16 %v1751
    %v2280 = vunpack.c.l.b16 %v1752
    %v2281 = vunpack.c.l.b16 %v1753
    %v2282 = vunpack.c.l.b16 %v1754
    %v2283 = vunpack.c.l.b16 %v1755
    %v2284 = vunpack.c.l.b16 %v1756
    %v2285 = vunpack.c.l.b16 %v1757
    %v2286 = vpack.c.b16 %v2223, %v2222
    %v2287 = vpack.c.b16 %v2225, %v2224
    %v2288 = vpack.c.b16 %v2227, %v2226
    %v2289 = vpack.c.b16 %v2229, %v2228
    %v2290 = vpack.c.b16 %v2231, %v2230
    %v2291 = vpack.c.b16 %v2233, %v2232
    %v2292 = vpack.c.b16 %v2235, %v2234
    %v2293 = vpack.c.b16 %v2237, %v2236
    %v2294 = vpack.c.b16 %v2239, %v2238
    %v2295 = vpack.c.b16 %v2241, %v2240
    %v2296 = vpack.c.b16 %v2243, %v2242
    %v2297 = vpack.c.b16 %v2245, %v2244
    %v2298 = vpack.c.b16 %v2247, %v2246
    %v2299 = vpack.c.b16 %v2249, %v2248
    %v2300 = vpack.c.b16 %v2251, %v2250
    %v2301 = vpack.c.b16 %v2253, %v2252
    %v2302 = vpack.c.b16 %v2255, %v2254
    %v2303 = vpack.c.b16 %v2257, %v2256
    %v2304 = vpack.c.b16 %v2259, %v2258
    %v2305 = vpack.c.b16 %v2261, %v2260
    %v2306 = vpack.c.b16 %v2263, %v2262
    %v2307 = vpack.c.b16 %v2265, %v2264
    %v2308 = vpack.c.b16 %v2267, %v2266
    %v2309 = vpack.c.b16 %v2269, %v2268
    %v2310 = vpack.c.b16 %v2271, %v2270
    %v2311 = vpack.c.b16 %v2273, %v2272
    %v2312 = vpack.c.b16 %v2275, %v2274
    %v2313 = vpack.c.b16 %v2277, %v2276
    %v2314 = vpack.c.b16 %v2279, %v2278
    %v2315 = vpack.c.b16 %v2281, %v2280
    %v2316 = vpack.c.b16 %v2283, %v2282
    %v2317 = vpack.c.b16 %v2285, %v2284
    %2350 = vmatprep.subr.bf16.mxu0 %v1759
    %2351 = vmatpush1.bf16.msra.mxu0 %v1758
    %2352 = vmatprep.subr.bf16.mxu0 %v1761
    %2353 = vmatpush1.bf16.msra.mxu0 %v1760
    %2354 = vmatprep.subr.bf16.mxu0 %v1763
    %2355 = vmatpush1.bf16.msra.mxu0 %v1762
    %2356 = vmatprep.subr.bf16.mxu0 %v1765
    %2357 = vmatpush1.bf16.msra.mxu0 %v1764
    %2358 = vmatprep.subr.bf16.mxu0 %v1767
    %2359 = vmatpush1.bf16.msra.mxu0 %v1766
    %2360 = vmatprep.subr.bf16.mxu0 %v1769
    %2361 = vmatpush1.bf16.msra.mxu0 %v1768
    %2362 = vmatprep.subr.bf16.mxu0 %v1771
    %2363 = vmatpush1.bf16.msra.mxu0 %v1770
    %2364 = vmatprep.subr.bf16.mxu0 %v1773
    %2365 = vmatpush1.bf16.msra.mxu0 %v1772
    %2366 = vmatprep.subr.bf16.mxu0 0
    %2367 = vmatpush1.bf16.msra.mxu0 0
    %2368 = vmatprep.subr.bf16.mxu0 0
    %2369 = vmatpush1.bf16.msra.mxu0 0
    %2370 = vmatprep.subr.bf16.mxu0 0
    %2371 = vmatpush1.bf16.msra.mxu0 0
    %2372 = vmatprep.subr.bf16.mxu0 0
    %2373 = vmatpush1.bf16.msra.mxu0 0
    %2374 = vmatprep.subr.bf16.mxu0 0
    %2375 = vmatpush1.bf16.msra.mxu0 0
    %2376 = vmatprep.subr.bf16.mxu0 0
    %2377 = vmatpush1.bf16.msra.mxu0 0
    %2378 = vmatprep.subr.bf16.mxu0 0
    %2379 = vmatpush1.bf16.msra.mxu0 0
    %2380 = vmatprep.subr.bf16.mxu0 0
    %2381 = vmatpush1.bf16.msra.mxu0 0
    %2382 = vmatprep.mubr.bf16.mxu0 0
    %2383 = vmatmul.mubr.bf16.gmra.mrb[0].mxu0 %v2286
    %v2384 = vpop.f32.mrb[0].mxu0
    %v2385 = vadd.f32 %v1841, %v2384
    %v2386 = vpop.f32.mrb[0].mxu0
    %v2387 = vadd.f32 %v1841, %v2386
    %v2388 = vpop.f32.mrb[0].mxu0
    %v2389 = vadd.f32 %v1846, %v2388
    %v2390 = vpop.f32.mrb[0].mxu0
    %v2391 = vadd.f32 %v1846, %v2390
    %2392 = vmatprep.mubr.bf16.mxu0 0
    %2393 = vmatmul.mubr.bf16.gmra.mrb[0].mxu0 %v2287
    %v2394 = vpop.f32.mrb[0].mxu0
    %v2395 = vadd.f32 %v1851, %v2394
    %v2396 = vpop.f32.mrb[0].mxu0
    %v2397 = vadd.f32 %v1851, %v2396
    %v2398 = vpop.f32.mrb[0].mxu0
    %v2399 = vadd.f32 %v1856, %v2398
    %v2400 = vpop.f32.mrb[0].mxu0
    %v2401 = vadd.f32 %v1856, %v2400
    %2402 = vmatprep.mubr.bf16.mxu0 0
    %2403 = vmatmul.mubr.bf16.gmra.mrb[0].mxu0 %v2288
    %v2404 = vpop.f32.mrb[0].mxu0
    %v2405 = vadd.f32 %v1861, %v2404
    %v2406 = vpop.f32.mrb[0].mxu0
    %v2407 = vadd.f32 %v1861, %v2406
    %v2408 = vpop.f32.mrb[0].mxu0
    %v2409 = vadd.f32 %v1866, %v2408
    %v2410 = vpop.f32.mrb[0].mxu0
    %v2411 = vadd.f32 %v1866, %v2410
    %2412 = vmatprep.mubr.bf16.mxu0 0
    %2413 = vmatmul.mubr.bf16.gmra.mrb[0].mxu0 %v2289
    %v2414 = vpop.f32.mrb[0].mxu0
    %v2415 = vadd.f32 %v1871, %v2414
    %v2416 = vpop.f32.mrb[0].mxu0
    %v2417 = vadd.f32 %v1871, %v2416
    %v2418 = vpop.f32.mrb[0].mxu0
    %v2419 = vadd.f32 %v1876, %v2418
    %v2420 = vpop.f32.mrb[0].mxu0
    %v2421 = vadd.f32 %v1876, %v2420
    %2422 = vmatprep.mubr.bf16.mxu0 0
    %2423 = vmatmul.mubr.bf16.gmra.mrb[0].mxu0 %v2290
    %v2424 = vpop.f32.mrb[0].mxu0
    %v2425 = vadd.f32 %v1881, %v2424
    %v2426 = vpop.f32.mrb[0].mxu0
    %v2427 = vadd.f32 %v1881, %v2426
    %v2428 = vpop.f32.mrb[0].mxu0
    %v2429 = vadd.f32 %v1886, %v2428
    %v2430 = vpop.f32.mrb[0].mxu0
    %v2431 = vadd.f32 %v1886, %v2430
    %2432 = vmatprep.mubr.bf16.mxu0 0
    %2433 = vmatmul.mubr.bf16.gmra.mrb[0].mxu0 %v2291
    %v2434 = vpop.f32.mrb[0].mxu0
    %v2435 = vadd.f32 %v1891, %v2434
    %v2436 = vpop.f32.mrb[0].mxu0
    %v2437 = vadd.f32 %v1891, %v2436
    %v2438 = vpop.f32.mrb[0].mxu0
    %v2439 = vadd.f32 %v1896, %v2438
    %v2440 = vpop.f32.mrb[0].mxu0
    %v2441 = vadd.f32 %v1896, %v2440
    %2442 = vmatprep.mubr.bf16.mxu0 0
    %2443 = vmatmul.mubr.bf16.gmra.mrb[0].mxu0 %v2292
    %v2444 = vpop.f32.mrb[0].mxu0
    %v2445 = vadd.f32 %v1901, %v2444
    %v2446 = vpop.f32.mrb[0].mxu0
    %v2447 = vadd.f32 %v1901, %v2446
    %v2448 = vpop.f32.mrb[0].mxu0
    %v2449 = vadd.f32 %v1906, %v2448
    %v2450 = vpop.f32.mrb[0].mxu0
    %v2451 = vadd.f32 %v1906, %v2450
    %2452 = vmatprep.mubr.bf16.mxu0 0
    %2453 = vmatmul.mubr.bf16.gmra.mrb[0].mxu0 %v2293
    %v2454 = vpop.f32.mrb[0].mxu0
    %v2455 = vadd.f32 %v1911, %v2454
    %v2456 = vpop.f32.mrb[0].mxu0
    %v2457 = vadd.f32 %v1911, %v2456
    %v2458 = vpop.f32.mrb[0].mxu0
    %v2459 = vadd.f32 %v1916, %v2458
    %v2460 = vpop.f32.mrb[0].mxu0
    %v2461 = vadd.f32 %v1916, %v2460
    %2462 = vmatprep.mubr.bf16.mxu0 0
    %2463 = vmatmul.mubr.bf16.gmra.mrb[0].mxu0 %v2294
    %v2464 = vpop.f32.mrb[0].mxu0
    %v2465 = vadd.f32 %v1921, %v2464
    %v2466 = vpop.f32.mrb[0].mxu0
    %v2467 = vadd.f32 %v1921, %v2466
    %v2468 = vpop.f32.mrb[0].mxu0
    %v2469 = vadd.f32 %v1926, %v2468
    %v2470 = vpop.f32.mrb[0].mxu0
    %v2471 = vadd.f32 %v1926, %v2470
    %2472 = vmatprep.mubr.bf16.mxu0 0
    %2473 = vmatmul.mubr.bf16.gmra.mrb[0].mxu0 %v2295
    %v2474 = vpop.f32.mrb[0].mxu0
    %v2475 = vadd.f32 %v1931, %v2474
    %v2476 = vpop.f32.mrb[0].mxu0
    %v2477 = vadd.f32 %v1931, %v2476
    %v2478 = vpop.f32.mrb[0].mxu0
    %v2479 = vadd.f32 %v1936, %v2478
    %v2480 = vpop.f32.mrb[0].mxu0
    %v2481 = vadd.f32 %v1936, %v2480
    %2482 = vmatprep.mubr.bf16.mxu0 0
    %2483 = vmatmul.mubr.bf16.gmra.mrb[0].mxu0 %v2296
    %v2484 = vpop.f32.mrb[0].mxu0
    %v2485 = vadd.f32 %v1941, %v2484
    %v2486 = vpop.f32.mrb[0].mxu0
    %v2487 = vadd.f32 %v1941, %v2486
    %v2488 = vpop.f32.mrb[0].mxu0
    %v2489 = vadd.f32 %v1946, %v2488
    %v2490 = vpop.f32.mrb[0].mxu0
    %v2491 = vadd.f32 %v1946, %v2490
    %2492 = vmatprep.mubr.bf16.mxu0 0
    %2493 = vmatmul.mubr.bf16.gmra.mrb[0].mxu0 %v2297
    %v2494 = vpop.f32.mrb[0].mxu0
    %v2495 = vadd.f32 %v1951, %v2494
    %v2496 = vpop.f32.mrb[0].mxu0
    %v2497 = vadd.f32 %v1951, %v2496
    %v2498 = vpop.f32.mrb[0].mxu0
    %v2499 = vadd.f32 %v1956, %v2498
    %v2500 = vpop.f32.mrb[0].mxu0
    %v2501 = vadd.f32 %v1956, %v2500
    %2502 = vmatprep.mubr.bf16.mxu0 0
    %2503 = vmatmul.mubr.bf16.gmra.mrb[0].mxu0 %v2298
    %v2504 = vpop.f32.mrb[0].mxu0
    %v2505 = vadd.f32 %v1961, %v2504
    %v2506 = vpop.f32.mrb[0].mxu0
    %v2507 = vadd.f32 %v1961, %v2506
    %v2508 = vpop.f32.mrb[0].mxu0
    %v2509 = vadd.f32 %v1966, %v2508
    %v2510 = vpop.f32.mrb[0].mxu0
    %v2511 = vadd.f32 %v1966, %v2510
    %2512 = vmatprep.mubr.bf16.mxu0 0
    %2513 = vmatmul.mubr.bf16.gmra.mrb[0].mxu0 %v2299
    %v2514 = vpop.f32.mrb[0].mxu0
    %v2515 = vadd.f32 %v1971, %v2514
    %v2516 = vpop.f32.mrb[0].mxu0
    %v2517 = vadd.f32 %v1971, %v2516
    %v2518 = vpop.f32.mrb[0].mxu0
    %v2519 = vadd.f32 %v1976, %v2518
    %v2520 = vpop.f32.mrb[0].mxu0
    %v2521 = vadd.f32 %v1976, %v2520
    %2522 = vmatprep.mubr.bf16.mxu0 0
    %2523 = vmatmul.mubr.bf16.gmra.mrb[0].mxu0 %v2300
    %v2524 = vpop.f32.mrb[0].mxu0
    %v2525 = vadd.f32 %v1981, %v2524
    %v2526 = vpop.f32.mrb[0].mxu0
    %v2527 = vadd.f32 %v1981, %v2526
    %v2528 = vpop.f32.mrb[0].mxu0
    %v2529 = vadd.f32 %v1986, %v2528
    %v2530 = vpop.f32.mrb[0].mxu0
    %v2531 = vadd.f32 %v1986, %v2530
    %2532 = vmatprep.mubr.bf16.mxu0 0
    %2533 = vmatmul.mubr.bf16.gmra.mrb[0].mxu0 %v2301
    %v2534 = vpop.f32.mrb[0].mxu0
    %v2535 = vadd.f32 %v1991, %v2534
    %v2536 = vpop.f32.mrb[0].mxu0
    %v2537 = vadd.f32 %v1991, %v2536
    %v2538 = vpop.f32.mrb[0].mxu0
    %v2539 = vadd.f32 %v1996, %v2538
    %v2540 = vpop.f32.mrb[0].mxu0
    %v2541 = vadd.f32 %v1996, %v2540
    %2542 = vmatprep.mubr.bf16.mxu0 0
    %2543 = vmatmul.mubr.bf16.gmra.mrb[0].mxu0 %v2302
    %v2544 = vpop.f32.mrb[0].mxu0
    %v2545 = vadd.f32 %v2001, %v2544
    %v2546 = vpop.f32.mrb[0].mxu0
    %v2547 = vadd.f32 %v2001, %v2546
    %v2548 = vpop.f32.mrb[0].mxu0
    %v2549 = vadd.f32 %v2006, %v2548
    %v2550 = vpop.f32.mrb[0].mxu0
    %v2551 = vadd.f32 %v2006, %v2550
    %2552 = vmatprep.mubr.bf16.mxu0 0
    %2553 = vmatmul.mubr.bf16.gmra.mrb[0].mxu0 %v2303
    %v2554 = vpop.f32.mrb[0].mxu0
    %v2555 = vadd.f32 %v2011, %v2554
    %v2556 = vpop.f32.mrb[0].mxu0
    %v2557 = vadd.f32 %v2011, %v2556
    %v2558 = vpop.f32.mrb[0].mxu0
    %v2559 = vadd.f32 %v2016, %v2558
    %v2560 = vpop.f32.mrb[0].mxu0
    %v2561 = vadd.f32 %v2016, %v2560
    %2562 = vmatprep.mubr.bf16.mxu0 0
    %2563 = vmatmul.mubr.bf16.gmra.mrb[0].mxu0 %v2304
    %v2564 = vpop.f32.mrb[0].mxu0
    %v2565 = vadd.f32 %v2021, %v2564
    %v2566 = vpop.f32.mrb[0].mxu0
    %v2567 = vadd.f32 %v2021, %v2566
    %v2568 = vpop.f32.mrb[0].mxu0
    %v2569 = vadd.f32 %v2026, %v2568
    %v2570 = vpop.f32.mrb[0].mxu0
    %v2571 = vadd.f32 %v2026, %v2570
    %2572 = vmatprep.mubr.bf16.mxu0 0
    %2573 = vmatmul.mubr.bf16.gmra.mrb[0].mxu0 %v2305
    %v2574 = vpop.f32.mrb[0].mxu0
    %v2575 = vadd.f32 %v2031, %v2574
    %v2576 = vpop.f32.mrb[0].mxu0
    %v2577 = vadd.f32 %v2031, %v2576
    %v2578 = vpop.f32.mrb[0].mxu0
    %v2579 = vadd.f32 %v2036, %v2578
    %v2580 = vpop.f32.mrb[0].mxu0
    %v2581 = vadd.f32 %v2036, %v2580
    %2582 = vmatprep.mubr.bf16.mxu0 0
    %2583 = vmatmul.mubr.bf16.gmra.mrb[0].mxu0 %v2306
    %v2584 = vpop.f32.mrb[0].mxu0
    %v2585 = vadd.f32 %v2041, %v2584
    %v2586 = vpop.f32.mrb[0].mxu0
    %v2587 = vadd.f32 %v2041, %v2586
    %v2588 = vpop.f32.mrb[0].mxu0
    %v2589 = vadd.f32 %v2046, %v2588
    %v2590 = vpop.f32.mrb[0].mxu0
    %v2591 = vadd.f32 %v2046, %v2590
    %2592 = vmatprep.mubr.bf16.mxu0 0
    %2593 = vmatmul.mubr.bf16.gmra.mrb[0].mxu0 %v2307
    %v2594 = vpop.f32.mrb[0].mxu0
    %v2595 = vadd.f32 %v2051, %v2594
    %v2596 = vpop.f32.mrb[0].mxu0
    %v2597 = vadd.f32 %v2051, %v2596
    %v2598 = vpop.f32.mrb[0].mxu0
    %v2599 = vadd.f32 %v2056, %v2598
    %v2600 = vpop.f32.mrb[0].mxu0
    %v2601 = vadd.f32 %v2056, %v2600
    %2602 = vmatprep.mubr.bf16.mxu0 0
    %2603 = vmatmul.mubr.bf16.gmra.mrb[0].mxu0 %v2308
    %v2604 = vpop.f32.mrb[0].mxu0
    %v2605 = vadd.f32 %v2061, %v2604
    %v2606 = vpop.f32.mrb[0].mxu0
    %v2607 = vadd.f32 %v2061, %v2606
    %v2608 = vpop.f32.mrb[0].mxu0
    %v2609 = vadd.f32 %v2066, %v2608
    %v2610 = vpop.f32.mrb[0].mxu0
    %v2611 = vadd.f32 %v2066, %v2610
    %2612 = vmatprep.mubr.bf16.mxu0 0
    %2613 = vmatmul.mubr.bf16.gmra.mrb[0].mxu0 %v2309
    %v2614 = vpop.f32.mrb[0].mxu0
    %v2615 = vadd.f32 %v2071, %v2614
    %v2616 = vpop.f32.mrb[0].mxu0
    %v2617 = vadd.f32 %v2071, %v2616
    %v2618 = vpop.f32.mrb[0].mxu0
    %v2619 = vadd.f32 %v2076, %v2618
    %v2620 = vpop.f32.mrb[0].mxu0
    %v2621 = vadd.f32 %v2076, %v2620
    %2622 = vmatprep.mubr.bf16.mxu0 0
    %2623 = vmatmul.mubr.bf16.gmra.mrb[0].mxu0 %v2310
    %v2624 = vpop.f32.mrb[0].mxu0
    %v2625 = vadd.f32 %v2081, %v2624
    %v2626 = vpop.f32.mrb[0].mxu0
    %v2627 = vadd.f32 %v2081, %v2626
    %v2628 = vpop.f32.mrb[0].mxu0
    %v2629 = vadd.f32 %v2086, %v2628
    %v2630 = vpop.f32.mrb[0].mxu0
    %v2631 = vadd.f32 %v2086, %v2630
    %2632 = vmatprep.mubr.bf16.mxu0 0
    %2633 = vmatmul.mubr.bf16.gmra.mrb[0].mxu0 %v2311
    %v2634 = vpop.f32.mrb[0].mxu0
    %v2635 = vadd.f32 %v2091, %v2634
    %v2636 = vpop.f32.mrb[0].mxu0
    %v2637 = vadd.f32 %v2091, %v2636
    %v2638 = vpop.f32.mrb[0].mxu0
    %v2639 = vadd.f32 %v2096, %v2638
    %v2640 = vpop.f32.mrb[0].mxu0
    %v2641 = vadd.f32 %v2096, %v2640
    %2642 = vmatprep.mubr.bf16.mxu0 0
    %2643 = vmatmul.mubr.bf16.gmra.mrb[0].mxu0 %v2312
    %v2644 = vpop.f32.mrb[0].mxu0
    %v2645 = vadd.f32 %v2101, %v2644
    %v2646 = vpop.f32.mrb[0].mxu0
    %v2647 = vadd.f32 %v2101, %v2646
    %v2648 = vpop.f32.mrb[0].mxu0
    %v2649 = vadd.f32 %v2106, %v2648
    %v2650 = vpop.f32.mrb[0].mxu0
    %v2651 = vadd.f32 %v2106, %v2650
    %2652 = vmatprep.mubr.bf16.mxu0 0
    %2653 = vmatmul.mubr.bf16.gmra.mrb[0].mxu0 %v2313
    %v2654 = vpop.f32.mrb[0].mxu0
    %v2655 = vadd.f32 %v2111, %v2654
    %v2656 = vpop.f32.mrb[0].mxu0
    %v2657 = vadd.f32 %v2111, %v2656
    %v2658 = vpop.f32.mrb[0].mxu0
    %v2659 = vadd.f32 %v2116, %v2658
    %v2660 = vpop.f32.mrb[0].mxu0
    %v2661 = vadd.f32 %v2116, %v2660
    %2662 = vmatprep.mubr.bf16.mxu0 0
    %2663 = vmatmul.mubr.bf16.gmra.mrb[0].mxu0 %v2314
    %v2664 = vpop.f32.mrb[0].mxu0
    %v2665 = vadd.f32 %v2121, %v2664
    %v2666 = vpop.f32.mrb[0].mxu0
    %v2667 = vadd.f32 %v2121, %v2666
    %v2668 = vpop.f32.mrb[0].mxu0
    %v2669 = vadd.f32 %v2126, %v2668
    %v2670 = vpop.f32.mrb[0].mxu0
    %v2671 = vadd.f32 %v2126, %v2670
    %2672 = vmatprep.mubr.bf16.mxu0 0
    %2673 = vmatmul.mubr.bf16.gmra.mrb[0].mxu0 %v2315
    %v2674 = vpop.f32.mrb[0].mxu0
    %v2675 = vadd.f32 %v2131, %v2674
    %v2676 = vpop.f32.mrb[0].mxu0
    %v2677 = vadd.f32 %v2131, %v2676
    %v2678 = vpop.f32.mrb[0].mxu0
    %v2679 = vadd.f32 %v2136, %v2678
    %v2680 = vpop.f32.mrb[0].mxu0
    %v2681 = vadd.f32 %v2136, %v2680
    %2682 = vmatprep.mubr.bf16.mxu0 0
    %2683 = vmatmul.mubr.bf16.gmra.mrb[0].mxu0 %v2316
    %v2684 = vpop.f32.mrb[0].mxu0
    %v2685 = vadd.f32 %v2141, %v2684
    %v2686 = vpop.f32.mrb[0].mxu0
    %v2687 = vadd.f32 %v2141, %v2686
    %v2688 = vpop.f32.mrb[0].mxu0
    %v2689 = vadd.f32 %v2146, %v2688
    %v2690 = vpop.f32.mrb[0].mxu0
    %v2691 = vadd.f32 %v2146, %v2690
    %2692 = vmatprep.mubr.bf16.mxu0 0
    %2693 = vmatmul.mubr.bf16.gmra.mrb[0].mxu0 %v2317
    %v2694 = vpop.f32.mrb[0].mxu0
    %v2695 = vadd.f32 %v2151, %v2694
    %v2696 = vpop.f32.mrb[0].mxu0
    %v2697 = vadd.f32 %v2151, %v2696
    %v2698 = vpop.f32.mrb[0].mxu0
    %v2699 = vadd.f32 %v2156, %v2698
    %v2700 = vpop.f32.mrb[0].mxu0
    %v2701 = vadd.f32 %v2156, %v2700
    %2702 = vdwg.mxu0
    %v2703 = vmax.f32 %v2385, 0.0
    %v2704 = vmax.f32 %v2387, 0.0
    %v2705 = vmax.f32 %v2389, 0.0
    %v2706 = vmax.f32 %v2391, 0.0
    %v2707 = vmax.f32 %v2395, 0.0
    %v2708 = vmax.f32 %v2397, 0.0
    %v2709 = vmax.f32 %v2399, 0.0
    %v2710 = vmax.f32 %v2401, 0.0
    %v2711 = vmax.f32 %v2405, 0.0
    %v2712 = vmax.f32 %v2407, 0.0
    %v2713 = vmax.f32 %v2409, 0.0
    %v2714 = vmax.f32 %v2411, 0.0
    %v2715 = vmax.f32 %v2415, 0.0
    %v2716 = vmax.f32 %v2417, 0.0
    %v2717 = vmax.f32 %v2419, 0.0
    %v2718 = vmax.f32 %v2421, 0.0
    %v2719 = vmax.f32 %v2425, 0.0
    %v2720 = vmax.f32 %v2427, 0.0
    %v2721 = vmax.f32 %v2429, 0.0
    %v2722 = vmax.f32 %v2431, 0.0
    %v2723 = vmax.f32 %v2435, 0.0
    %v2724 = vmax.f32 %v2437, 0.0
    %v2725 = vmax.f32 %v2439, 0.0
    %v2726 = vmax.f32 %v2441, 0.0
    %v2727 = vmax.f32 %v2445, 0.0
    %v2728 = vmax.f32 %v2447, 0.0
    %v2729 = vmax.f32 %v2449, 0.0
    %v2730 = vmax.f32 %v2451, 0.0
    %v2731 = vmax.f32 %v2455, 0.0
    %v2732 = vmax.f32 %v2457, 0.0
    %v2733 = vmax.f32 %v2459, 0.0
    %v2734 = vmax.f32 %v2461, 0.0
    %v2735 = vmax.f32 %v2465, 0.0
    %v2736 = vmax.f32 %v2467, 0.0
    %v2737 = vmax.f32 %v2469, 0.0
    %v2738 = vmax.f32 %v2471, 0.0
    %v2739 = vmax.f32 %v2475, 0.0
    %v2740 = vmax.f32 %v2477, 0.0
    %v2741 = vmax.f32 %v2479, 0.0
    %v2742 = vmax.f32 %v2481, 0.0
    %v2743 = vmax.f32 %v2485, 0.0
    %v2744 = vmax.f32 %v2487, 0.0
    %v2745 = vmax.f32 %v2489, 0.0
    %v2746 = vmax.f32 %v2491, 0.0
    %v2747 = vmax.f32 %v2495, 0.0
    %v2748 = vmax.f32 %v2497, 0.0
    %v2749 = vmax.f32 %v2499, 0.0
    %v2750 = vmax.f32 %v2501, 0.0
    %v2751 = vmax.f32 %v2505, 0.0
    %v2752 = vmax.f32 %v2507, 0.0
    %v2753 = vmax.f32 %v2509, 0.0
    %v2754 = vmax.f32 %v2511, 0.0
    %v2755 = vmax.f32 %v2515, 0.0
    %v2756 = vmax.f32 %v2517, 0.0
    %v2757 = vmax.f32 %v2519, 0.0
    %v2758 = vmax.f32 %v2521, 0.0
    %v2759 = vmax.f32 %v2525, 0.0
    %v2760 = vmax.f32 %v2527, 0.0
    %v2761 = vmax.f32 %v2529, 0.0
    %v2762 = vmax.f32 %v2531, 0.0
    %v2763 = vmax.f32 %v2535, 0.0
    %v2764 = vmax.f32 %v2537, 0.0
    %v2765 = vmax.f32 %v2539, 0.0
    %v2766 = vmax.f32 %v2541, 0.0
    %v2767 = vmax.f32 %v2545, 0.0
    %v2768 = vmax.f32 %v2547, 0.0
    %v2769 = vmax.f32 %v2549, 0.0
    %v2770 = vmax.f32 %v2551, 0.0
    %v2771 = vmax.f32 %v2555, 0.0
    %v2772 = vmax.f32 %v2557, 0.0
    %v2773 = vmax.f32 %v2559, 0.0
    %v2774 = vmax.f32 %v2561, 0.0
    %v2775 = vmax.f32 %v2565, 0.0
    %v2776 = vmax.f32 %v2567, 0.0
    %v2777 = vmax.f32 %v2569, 0.0
    %v2778 = vmax.f32 %v2571, 0.0
    %v2779 = vmax.f32 %v2575, 0.0
    %v2780 = vmax.f32 %v2577, 0.0
    %v2781 = vmax.f32 %v2579, 0.0
    %v2782 = vmax.f32 %v2581, 0.0
    %v2783 = vmax.f32 %v2585, 0.0
    %v2784 = vmax.f32 %v2587, 0.0
    %v2785 = vmax.f32 %v2589, 0.0
    %v2786 = vmax.f32 %v2591, 0.0
    %v2787 = vmax.f32 %v2595, 0.0
    %v2788 = vmax.f32 %v2597, 0.0
    %v2789 = vmax.f32 %v2599, 0.0
    %v2790 = vmax.f32 %v2601, 0.0
    %v2791 = vmax.f32 %v2605, 0.0
    %v2792 = vmax.f32 %v2607, 0.0
    %v2793 = vmax.f32 %v2609, 0.0
    %v2794 = vmax.f32 %v2611, 0.0
    %v2795 = vmax.f32 %v2615, 0.0
    %v2796 = vmax.f32 %v2617, 0.0
    %v2797 = vmax.f32 %v2619, 0.0
    %v2798 = vmax.f32 %v2621, 0.0
    %v2799 = vmax.f32 %v2625, 0.0
    %v2800 = vmax.f32 %v2627, 0.0
    %v2801 = vmax.f32 %v2629, 0.0
    %v2802 = vmax.f32 %v2631, 0.0
    %v2803 = vmax.f32 %v2635, 0.0
    %v2804 = vmax.f32 %v2637, 0.0
    %v2805 = vmax.f32 %v2639, 0.0
    %v2806 = vmax.f32 %v2641, 0.0
    %v2807 = vmax.f32 %v2645, 0.0
    %v2808 = vmax.f32 %v2647, 0.0
    %v2809 = vmax.f32 %v2649, 0.0
    %v2810 = vmax.f32 %v2651, 0.0
    %v2811 = vmax.f32 %v2655, 0.0
    %v2812 = vmax.f32 %v2657, 0.0
    %v2813 = vmax.f32 %v2659, 0.0
    %v2814 = vmax.f32 %v2661, 0.0
    %v2815 = vmax.f32 %v2665, 0.0
    %v2816 = vmax.f32 %v2667, 0.0
    %v2817 = vmax.f32 %v2669, 0.0
    %v2818 = vmax.f32 %v2671, 0.0
    %v2819 = vmax.f32 %v2675, 0.0
    %v2820 = vmax.f32 %v2677, 0.0
    %v2821 = vmax.f32 %v2679, 0.0
    %v2822 = vmax.f32 %v2681, 0.0
    %v2823 = vmax.f32 %v2685, 0.0
    %v2824 = vmax.f32 %v2687, 0.0
    %v2825 = vmax.f32 %v2689, 0.0
    %v2826 = vmax.f32 %v2691, 0.0
    %v2827 = vmax.f32 %v2695, 0.0
    %v2828 = vmax.f32 %v2697, 0.0
    %v2829 = vmax.f32 %v2699, 0.0
    %v2830 = vmax.f32 %v2701, 0.0
    %v2831 = vld [vmem:[%s6] sm:$0xff]
    %v2832 = vld [vmem:[%s6 + $0x8] sm:$0xff]
    %v2833 = vpack.c.bf16 %v2705, %v2703
    %v2834 = vpack.c.bf16 %v2706, %v2704
    %v2835 = vpack.c.bf16 %v2709, %v2707
    %v2836 = vpack.c.bf16 %v2710, %v2708
    %v2837 = vpack.c.bf16 %v2713, %v2711
    %v2838 = vpack.c.bf16 %v2714, %v2712
    %v2839 = vpack.c.bf16 %v2717, %v2715
    %v2840 = vpack.c.bf16 %v2718, %v2716
    %v2841 = vpack.c.bf16 %v2721, %v2719
    %v2842 = vpack.c.bf16 %v2722, %v2720
    %v2843 = vpack.c.bf16 %v2725, %v2723
    %v2844 = vpack.c.bf16 %v2726, %v2724
    %v2845 = vpack.c.bf16 %v2729, %v2727
    %v2846 = vpack.c.bf16 %v2730, %v2728
    %v2847 = vpack.c.bf16 %v2733, %v2731
    %v2848 = vpack.c.bf16 %v2734, %v2732
    %v2849 = vpack.c.bf16 %v2737, %v2735
    %v2850 = vpack.c.bf16 %v2738, %v2736
    %v2851 = vpack.c.bf16 %v2741, %v2739
    %v2852 = vpack.c.bf16 %v2742, %v2740
    %v2853 = vpack.c.bf16 %v2745, %v2743
    %v2854 = vpack.c.bf16 %v2746, %v2744
    %v2855 = vpack.c.bf16 %v2749, %v2747
    %v2856 = vpack.c.bf16 %v2750, %v2748
    %v2857 = vpack.c.bf16 %v2753, %v2751
    %v2858 = vpack.c.bf16 %v2754, %v2752
    %v2859 = vpack.c.bf16 %v2757, %v2755
    %v2860 = vpack.c.bf16 %v2758, %v2756
    %v2861 = vpack.c.bf16 %v2761, %v2759
    %v2862 = vpack.c.bf16 %v2762, %v2760
    %v2863 = vpack.c.bf16 %v2765, %v2763
    %v2864 = vpack.c.bf16 %v2766, %v2764
    %v2865 = vpack.c.bf16 %v2769, %v2767
    %v2866 = vpack.c.bf16 %v2770, %v2768
    %v2867 = vpack.c.bf16 %v2773, %v2771
    %v2868 = vpack.c.bf16 %v2774, %v2772
    %v2869 = vpack.c.bf16 %v2777, %v2775
    %v2870 = vpack.c.bf16 %v2778, %v2776
    %v2871 = vpack.c.bf16 %v2781, %v2779
    %v2872 = vpack.c.bf16 %v2782, %v2780
    %v2873 = vpack.c.bf16 %v2785, %v2783
    %v2874 = vpack.c.bf16 %v2786, %v2784
    %v2875 = vpack.c.bf16 %v2789, %v2787
    %v2876 = vpack.c.bf16 %v2790, %v2788
    %v2877 = vpack.c.bf16 %v2793, %v2791
    %v2878 = vpack.c.bf16 %v2794, %v2792
    %v2879 = vpack.c.bf16 %v2797, %v2795
    %v2880 = vpack.c.bf16 %v2798, %v2796
    %v2881 = vpack.c.bf16 %v2801, %v2799
    %v2882 = vpack.c.bf16 %v2802, %v2800
    %v2883 = vpack.c.bf16 %v2805, %v2803
    %v2884 = vpack.c.bf16 %v2806, %v2804
    %v2885 = vpack.c.bf16 %v2809, %v2807
    %v2886 = vpack.c.bf16 %v2810, %v2808
    %v2887 = vpack.c.bf16 %v2813, %v2811
    %v2888 = vpack.c.bf16 %v2814, %v2812
    %v2889 = vpack.c.bf16 %v2817, %v2815
    %v2890 = vpack.c.bf16 %v2818, %v2816
    %v2891 = vpack.c.bf16 %v2821, %v2819
    %v2892 = vpack.c.bf16 %v2822, %v2820
    %v2893 = vpack.c.bf16 %v2825, %v2823
    %v2894 = vpack.c.bf16 %v2826, %v2824
    %v2895 = vpack.c.bf16 %v2829, %v2827
    %v2896 = vpack.c.bf16 %v2830, %v2828
    %v2899 = vunpack.c.l.b16 %v2831
    %v2900 = vunpack.c.h.b16 %v2831
    %v2901 = vunpack.c.l.b16 %v2832
    %v2902 = vunpack.c.h.b16 %v2832
    %v2903 = vpack.c.b16 %v2899, %v2899
    %v2904 = vpack.c.b16 %v2900, %v2900
    %v2905 = vpack.c.b16 %v2901, %v2901
    %v2906 = vpack.c.b16 %v2902, %v2902
    %2911 = vmatprep.subr.bf16.mxu0 %v2834
    %2912 = vmatpush1.bf16.msra.mxu0 %v2833
    %2913 = vmatprep.subr.bf16.mxu0 %v2836
    %2914 = vmatpush1.bf16.msra.mxu0 %v2835
    %2915 = vmatprep.subr.bf16.mxu0 %v2838
    %2916 = vmatpush1.bf16.msra.mxu0 %v2837
    %2917 = vmatprep.subr.bf16.mxu0 %v2840
    %2918 = vmatpush1.bf16.msra.mxu0 %v2839
    %2919 = vmatprep.subr.bf16.mxu0 %v2842
    %2920 = vmatpush1.bf16.msra.mxu0 %v2841
    %2921 = vmatprep.subr.bf16.mxu0 %v2844
    %2922 = vmatpush1.bf16.msra.mxu0 %v2843
    %2923 = vmatprep.subr.bf16.mxu0 %v2846
    %2924 = vmatpush1.bf16.msra.mxu0 %v2845
    %2925 = vmatprep.subr.bf16.mxu0 %v2848
    %2926 = vmatpush1.bf16.msra.mxu0 %v2847
    %2927 = vmatprep.subr.bf16.mxu0 %v2850
    %2928 = vmatpush1.bf16.msra.mxu0 %v2849
    %2929 = vmatprep.subr.bf16.mxu0 %v2852
    %2930 = vmatpush1.bf16.msra.mxu0 %v2851
    %2931 = vmatprep.subr.bf16.mxu0 %v2854
    %2932 = vmatpush1.bf16.msra.mxu0 %v2853
    %2933 = vmatprep.subr.bf16.mxu0 %v2856
    %2934 = vmatpush1.bf16.msra.mxu0 %v2855
    %2935 = vmatprep.subr.bf16.mxu0 %v2858
    %2936 = vmatpush1.bf16.msra.mxu0 %v2857
    %2937 = vmatprep.subr.bf16.mxu0 %v2860
    %2938 = vmatpush1.bf16.msra.mxu0 %v2859
    %2939 = vmatprep.subr.bf16.mxu0 %v2862
    %2940 = vmatpush1.bf16.msra.mxu0 %v2861
    %2941 = vmatprep.subr.bf16.mxu0 %v2864
    %2942 = vmatpush1.bf16.msra.mxu0 %v2863
    %2943 = vmatprep.mubr.bf16.mxu0 %v2904
    %2944 = vmatmul.mubr.bf16.gmra.mrb[0].mxu0 %v2903
    %v2945 = vpop.f32.mrb[0].mxu0
    %v2946 = vadd.f32 0.0, %v2945
    %v2947 = vpop.f32.mrb[0].mxu0
    %v2948 = vadd.f32 0.0, %v2947
    %v2949 = vpop.f32.mrb[0].mxu0
    %v2950 = vpop.f32.mrb[0].mxu0
    %2951 = vdwg.mxu0
    %2952 = vmatprep.subr.bf16.mxu0 %v2866
    %2953 = vmatpush1.bf16.msra.mxu0 %v2865
    %2954 = vmatprep.subr.bf16.mxu0 %v2868
    %2955 = vmatpush1.bf16.msra.mxu0 %v2867
    %2956 = vmatprep.subr.bf16.mxu0 %v2870
    %2957 = vmatpush1.bf16.msra.mxu0 %v2869
    %2958 = vmatprep.subr.bf16.mxu0 %v2872
    %2959 = vmatpush1.bf16.msra.mxu0 %v2871
    %2960 = vmatprep.subr.bf16.mxu0 %v2874
    %2961 = vmatpush1.bf16.msra.mxu0 %v2873
    %2962 = vmatprep.subr.bf16.mxu0 %v2876
    %2963 = vmatpush1.bf16.msra.mxu0 %v2875
    %2964 = vmatprep.subr.bf16.mxu0 %v2878
    %2965 = vmatpush1.bf16.msra.mxu0 %v2877
    %2966 = vmatprep.subr.bf16.mxu0 %v2880
    %2967 = vmatpush1.bf16.msra.mxu0 %v2879
    %2968 = vmatprep.subr.bf16.mxu0 %v2882
    %2969 = vmatpush1.bf16.msra.mxu0 %v2881
    %2970 = vmatprep.subr.bf16.mxu0 %v2884
    %2971 = vmatpush1.bf16.msra.mxu0 %v2883
    %2972 = vmatprep.subr.bf16.mxu0 %v2886
    %2973 = vmatpush1.bf16.msra.mxu0 %v2885
    %2974 = vmatprep.subr.bf16.mxu0 %v2888
    %2975 = vmatpush1.bf16.msra.mxu0 %v2887
    %2976 = vmatprep.subr.bf16.mxu0 %v2890
    %2977 = vmatpush1.bf16.msra.mxu0 %v2889
    %2978 = vmatprep.subr.bf16.mxu0 %v2892
    %2979 = vmatpush1.bf16.msra.mxu0 %v2891
    %2980 = vmatprep.subr.bf16.mxu0 %v2894
    %2981 = vmatpush1.bf16.msra.mxu0 %v2893
    %2982 = vmatprep.subr.bf16.mxu0 %v2896
    %2983 = vmatpush1.bf16.msra.mxu0 %v2895
    %2984 = vmatprep.mubr.bf16.mxu0 %v2906
    %2985 = vmatmul.mubr.bf16.gmra.mrb[0].mxu0 %v2905
    %v2986 = vpop.f32.mrb[0].mxu0
    %v2987 = vadd.f32 %v2946, %v2986
    %v2988 = vpop.f32.mrb[0].mxu0
    %v2989 = vadd.f32 %v2948, %v2988
    %v2990 = vpop.f32.mrb[0].mxu0
    %v2991 = vpop.f32.mrb[0].mxu0
    %2992 = vdwg.mxu0
    %v2993 = vadd.f32 %v1126, %v412
    %v2994 = vadd.f32 %v1128, %v745
    %v2995 = vld [vmem:[%s2] sm:$0x77]
    %v2997 = vcombine.high %v2995, %v2995
    %v2999 = vsub.f32 %v2993, %v2995
    %v3000 = vsub.f32 %v2994, %v2997
    %v3003 = vrot.slane %v2987, 5
    %v3004 = vrot.slane %v2989, 5
    %vm3007 = vcmask 1042432
    %v3008 = vsel %vm3007, %v2999, %v3003
    %v3009 = vsel %vm3007, %v3000, %v3004
    %v3012 = vcombine.low %v3008, %v3009
    %3014 = vst [vmem:[#allocation7] sm:$0xff] %v3012
    // Predicated region
    $region42: #{tpu_custom_call.1} parent=1 // pred_check
      _
    $region43: #{tpu_custom_call.1} parent=1 // pred_check_branch
      %3016 = sbr.rel (0) target = $region45
    $region44: #{tpu_custom_call.1} parent=1 // pred_region
      %s3018 = ssub.s32 128, 128
      %3019 = vsyncadd [#allocation4], %s3018
      %s3021 = sshll.u32 [#allocation7], 4
      %s3022 = int_to_ptr.vmem [resolvable:$true] %s3021
      %3024 = dma.vmem_to_hbm [thread:$0]  %s3022, 128, %s8, [#allocation4]
    $region45: #{tpu_custom_call.1} parent=1 // pred_fallthru
      _
    // Predicated region
    $region46: #{tpu_custom_call.1} parent=1 // pred_check
      _
    $region47: #{tpu_custom_call.1} parent=1 // pred_check_branch
      %3026 = sbr.rel (0) target = $region49
    $region48: #{tpu_custom_call.1} parent=1 // pred_region
      %3027 = dma.done [#allocation4], 128
    $region49: #{tpu_custom_call.1} parent=1 // pred_fallthru
      _
    %3028 = vsyncpa [#allocation3], 1
    %3029 = vsyncpa [#allocation6], 1
    %3030 = vsyncpa [#allocation4], 1

</llo_original>
